<compile_context>
chip_gen: v6e
topology: v6e:2x2x1
jax: 0.10.0
libtpu: 0.0.40
codegen_flags: <defaults>
</compile_context>

<pallas_src>
import math

import jax
import jax.numpy as jnp
from jax.experimental import pallas as pl
from jax.experimental.pallas import tpu as pltpu  # noqa: F401  (kept for TPU-specific params if scaled up)

# ---------------- configuration (small, consistent with the module) ----------
BATCH = 2
SEQ = 8
DIM_MODEL = 32
NUM_HEADS = 4
DIM_Q = DIM_K = max(DIM_MODEL // NUM_HEADS, 1)   # = 8
DIM_FF = 64
EPS = 1e-5                                       # nn.LayerNorm default

HD = NUM_HEADS * DIM_Q                           # 32  (all heads concatenated)
ROWS = BATCH * SEQ                               # 16  (flattened token rows)
BH = NUM_HEADS * BATCH                           # 8   (head-major, batch-minor)


# ---------------------------- Pallas kernel ----------------------------------
def encoder_layer_kernel(x_ref, wqkv_ref, wo_ref, w1_ref, w2_ref, vec_ref, o_ref):
    # x: (ROWS, DIM_MODEL) = (16, 32) -- all tokens of all batches, flattened.
    x = x_ref[...]

    # Packed small vectors: row 0 = bqkv(96), 1 = b1(64), 2..7 = bo,g1,be1,b2,g2,be2 (32)
    vecs = vec_ref[...]
    bqkv = vecs[0:1, :]
    b1 = vecs[1:2, 0:DIM_FF]
    bo = vecs[2:3, 0:DIM_MODEL]
    g1 = vecs[3:4, 0:DIM_MODEL]
    be1 = vecs[4:5, 0:DIM_MODEL]
    b2 = vecs[5:6, 0:DIM_MODEL]
    g2 = vecs[6:7, 0:DIM_MODEL]
    be2 = vecs[7:8, 0:DIM_MODEL]

    # ---- fused QKV projection: one MXU push, (16,32) @ (32,96) ----
    qkv = jnp.dot(x, wqkv_ref[...], preferred_element_type=jnp.float32) + bqkv
    qkv3 = qkv.reshape(BATCH, SEQ, 3 * HD)        # major-dim split only (layout no-op)

    # ---- head-batched q/k/v: (BH, SEQ, DIM_Q), combined index = h*BATCH + b ----
    qh = jnp.concatenate(
        [qkv3[:, :, h * DIM_Q:(h + 1) * DIM_Q] for h in range(NUM_HEADS)], axis=0)
    kh = jnp.concatenate(
        [qkv3[:, :, HD + h * DIM_K:HD + (h + 1) * DIM_K] for h in range(NUM_HEADS)], axis=0)
    vh = jnp.concatenate(
        [qkv3[:, :, 2 * HD + h * DIM_K:2 * HD + (h + 1) * DIM_K] for h in range(NUM_HEADS)], axis=0)

    # ---- batched scaled-dot-product attention (no .T: contract last dims) ----
    inv_scale = 1.0 / math.sqrt(DIM_Q)
    s = jnp.einsum("bqd,bkd->bqk", qh, kh, preferred_element_type=jnp.float32) * inv_scale
    s = s - jnp.max(s, axis=-1, keepdims=True)
    p = jnp.exp(s)
    p = p * pl.reciprocal(jnp.sum(p, axis=-1, keepdims=True), approx=True)
    ctx = jnp.einsum("bqk,bkd->bqd", p, vh, preferred_element_type=jnp.float32)  # (BH, S, DIM_Q)

    # ---- output projection per head, summed over heads (avoids lane concat) ----
    # wo_ref: (BH, DIM_Q, DIM_MODEL), replicated per batch in the wrapper.
    proj = jnp.einsum("bsd,bdm->bsm", ctx, wo_ref[...], preferred_element_type=jnp.float32)
    attn3 = proj[0:BATCH]
    for h in range(1, NUM_HEADS):
        attn3 = attn3 + proj[h * BATCH:(h + 1) * BATCH]   # (BATCH, SEQ, DIM_MODEL)
    attn = attn3.reshape(ROWS, DIM_MODEL) + bo

    # ---- residual #1 + layernorm ----
    h1 = x + attn
    mu1 = jnp.mean(h1, axis=-1, keepdims=True)
    var1 = jnp.mean((h1 - mu1) ** 2, axis=-1, keepdims=True)
    y1 = (h1 - mu1) * jax.lax.rsqrt(var1 + EPS) * g1 + be1

    # ---- feed-forward ----
    ff = jnp.dot(y1, w1_ref[...], preferred_element_type=jnp.float32) + b1
    ff = jnp.maximum(ff, 0.0)
    ff = jnp.dot(ff, w2_ref[...], preferred_element_type=jnp.float32) + b2

    # ---- residual #2 + layernorm ----
    h2 = y1 + ff
    mu2 = jnp.mean(h2, axis=-1, keepdims=True)
    var2 = jnp.mean((h2 - mu2) ** 2, axis=-1, keepdims=True)
    o_ref[...] = (h2 - mu2) * jax.lax.rsqrt(var2 + EPS) * g2 + be2


# ------------------------------ wrapper ---------------------------------------
def transformer_encoder_layer(x, p):
    B, S, D = x.shape

    # Fuse Q/K/V weights & biases (layout plumbing, done once outside the kernel).
    wqkv = jnp.concatenate([p["wq"], p["wk"], p["wv"]], axis=1)          # (D, 3*HD)
    bqkv = jnp.concatenate([p["bq"], p["bk"], p["bv"]], axis=1)          # (1, 3*HD)

    # Head-batched output projection weight, replicated per batch element so the
    # kernel's combined batch index is h*B + b.
    wo_heads = p["wo"].reshape(NUM_HEADS, DIM_K, D)                      # (H, DIM_K, D)
    wo_hb = jnp.repeat(wo_heads, B, axis=0)                              # (H*B, DIM_K, D)

    # Pack all small vectors into one (8, 96) slab (static row slices in-kernel).
    width = 3 * HD
    pad = lambda v: jnp.pad(v, ((0, 0), (0, width - v.shape[1])))
    vecs = jnp.concatenate(
        [bqkv, pad(p["b1"]), pad(p["bo"]), pad(p["g1"]), pad(p["be1"]),
         pad(p["b2"]), pad(p["g2"]), pad(p["be2"])], axis=0)             # (8, 96)

    x_flat = x.reshape(B * S, D)

    out = pl.pallas_call(
        encoder_layer_kernel,
        out_shape=jax.ShapeDtypeStruct((B * S, D), jnp.float32),
        # No grid: the whole problem is one kernel invocation; all operands are
        # whole-array resident in VMEM (total footprint is a few tens of KB,
        # comfortably within the scoped VMEM limit on v5e/v6e/v7x).
    )(x_flat, wqkv, wo_hb, p["w1"], p["w2"], vecs)
    return out.reshape(B, S, D)


# ------------------------- pure-JAX reference ---------------------------------
def reference(x, p):
    def layernorm(h, g, b):
        mu = jnp.mean(h, axis=-1, keepdims=True)
        var = jnp.mean((h - mu) ** 2, axis=-1, keepdims=True)
        return (h - mu) * jax.lax.rsqrt(var + EPS) * g + b

    q = x @ p["wq"] + p["bq"]
    k = x @ p["wk"] + p["bk"]
    v = x @ p["wv"] + p["bv"]
    outs = []
    for h in range(NUM_HEADS):
        qh = q[..., h * DIM_Q:(h + 1) * DIM_Q]
        kh = k[..., h * DIM_K:(h + 1) * DIM_K]
        vh = v[..., h * DIM_K:(h + 1) * DIM_K]
        s = jnp.einsum("bqd,bkd->bqk", qh, kh) / math.sqrt(DIM_Q)
        pw = jax.nn.softmax(s, axis=-1)
        outs.append(jnp.einsum("bqk,bkd->bqd", pw, vh))
    attn = jnp.concatenate(outs, axis=-1) @ p["wo"] + p["bo"]
    y1 = layernorm(x + attn, p["g1"], p["be1"])
    ff = jnp.maximum(y1 @ p["w1"] + p["b1"], 0.0) @ p["w2"] + p["b2"]
    return layernorm(y1 + ff, p["g2"], p["be2"])


# ------------------------------- params / main ---------------------------------
def init_params(key):
    ks = jax.random.split(key, 12)
    s = 0.1
    return {
        # stacked per-head projection weights: (DIM_MODEL, NUM_HEADS*DIM_Q)
        "wq": jax.random.normal(ks[0], (DIM_MODEL, HD), jnp.float32) * s,
        "bq": jax.random.normal(ks[1], (1, HD), jnp.float32) * s,
        "wk": jax.random.normal(ks[2], (DIM_MODEL, HD), jnp.float32) * s,
        "bk": jax.random.normal(ks[3], (1, HD), jnp.float32) * s,
        "wv": jax.random.normal(ks[4], (DIM_MODEL, HD), jnp.float32) * s,
        "bv": jax.random.normal(ks[5], (1, HD), jnp.float32) * s,
        "wo": jax.random.normal(ks[6], (HD, DIM_MODEL), jnp.float32) * s,
        "bo": jax.random.normal(ks[7], (1, DIM_MODEL), jnp.float32) * s,
        "g1": jnp.ones((1, DIM_MODEL), jnp.float32),
        "be1": jnp.zeros((1, DIM_MODEL), jnp.float32),
        "w1": jax.random.normal(ks[8], (DIM_MODEL, DIM_FF), jnp.float32) * s,
        "b1": jax.random.normal(ks[9], (1, DIM_FF), jnp.float32) * s,
        "w2": jax.random.normal(ks[10], (DIM_FF, DIM_MODEL), jnp.float32) * s,
        "b2": jax.random.normal(ks[11], (1, DIM_MODEL), jnp.float32) * s,
        "g2": jnp.ones((1, DIM_MODEL), jnp.float32),
        "be2": jnp.zeros((1, DIM_MODEL), jnp.float32),
    }


if __name__ == "__main__":
    key = jax.random.PRNGKey(0)
    kx, kp = jax.random.split(key)
    x = jax.random.normal(kx, (BATCH, SEQ, DIM_MODEL), jnp.float32)
    params = init_params(kp)

    out = transformer_encoder_layer(x, params)
    out = jax.block_until_ready(out)

    ref = reference(x, params)
    assert out.shape == (BATCH, SEQ, DIM_MODEL)
    # Tolerance tightened from 2e-2; 5e-3 leaves margin for the approximate
    # (EUP) reciprocal used in the softmax denominator, everything else is f32.
    assert jnp.allclose(out, ref, atol=5e-3, rtol=5e-3), "mismatch vs. JAX reference"
    print("KERNEL_OK")
</pallas_src>

<mosaic_0001>
module attributes {stable_mosaic.version = 11 : i64} {
  func.func @encoder_layer_kernel(%arg0: memref<16x32xf32, #tpu.memory_space<vmem>>, %arg1: memref<32x96xf32, #tpu.memory_space<vmem>>, %arg2: memref<8x8x32xf32, #tpu.memory_space<vmem>>, %arg3: memref<32x64xf32, #tpu.memory_space<vmem>>, %arg4: memref<64x32xf32, #tpu.memory_space<vmem>>, %arg5: memref<8x96xf32, #tpu.memory_space<vmem>>, %arg6: memref<16x32xf32, #tpu.memory_space<vmem>>) attributes {dimension_semantics = [], scalar_prefetch = 0 : i64, scratch_operands = 0 : i64, tpu.core_type = #tpu.core_type<tc>} {
    %c0 = arith.constant 0 : index
    %c0_0 = arith.constant 0 : index
    %0 = vector.load %arg0[%c0, %c0_0] : memref<16x32xf32, #tpu.memory_space<vmem>>, vector<16x32xf32>
    %c0_1 = arith.constant 0 : index
    %c0_2 = arith.constant 0 : index
    %1 = vector.load %arg5[%c0_1, %c0_2] : memref<8x96xf32, #tpu.memory_space<vmem>>, vector<8x96xf32>
    %2 = vector.extract_strided_slice %1 {offsets = [0, 0], sizes = [1, 96], strides = [1, 1]} : vector<8x96xf32> to vector<1x96xf32>
    %3 = vector.extract_strided_slice %1 {offsets = [1, 0], sizes = [1, 64], strides = [1, 1]} : vector<8x96xf32> to vector<1x64xf32>
    %4 = vector.extract_strided_slice %1 {offsets = [2, 0], sizes = [1, 32], strides = [1, 1]} : vector<8x96xf32> to vector<1x32xf32>
    %5 = vector.extract_strided_slice %1 {offsets = [3, 0], sizes = [1, 32], strides = [1, 1]} : vector<8x96xf32> to vector<1x32xf32>
    %6 = vector.extract_strided_slice %1 {offsets = [4, 0], sizes = [1, 32], strides = [1, 1]} : vector<8x96xf32> to vector<1x32xf32>
    %7 = vector.extract_strided_slice %1 {offsets = [5, 0], sizes = [1, 32], strides = [1, 1]} : vector<8x96xf32> to vector<1x32xf32>
    %8 = vector.extract_strided_slice %1 {offsets = [6, 0], sizes = [1, 32], strides = [1, 1]} : vector<8x96xf32> to vector<1x32xf32>
    %9 = vector.extract_strided_slice %1 {offsets = [7, 0], sizes = [1, 32], strides = [1, 1]} : vector<8x96xf32> to vector<1x32xf32>
    %c0_3 = arith.constant 0 : index
    %c0_4 = arith.constant 0 : index
    %10 = vector.load %arg1[%c0_3, %c0_4] : memref<32x96xf32, #tpu.memory_space<vmem>>, vector<32x96xf32>
    %cst = arith.constant dense<0.000000e+00> : vector<16x96xf32>
    %11 = tpu.matmul %0, %10, %cst {dimension_numbers = #tpu.dot_dimension_numbers<[1], [0], [0], [1], [0, 0, 1, 1], [], []>} : vector<16x32xf32>, vector<32x96xf32>, vector<16x96xf32> -> vector<16x96xf32>
    %12 = vector.broadcast %2 : vector<1x96xf32> to vector<16x96xf32>
    %13 = arith.addf %11, %12 : vector<16x96xf32>
    %14 = vector.shape_cast %13 : vector<16x96xf32> to vector<2x8x96xf32>
    %15 = vector.extract_strided_slice %14 {offsets = [0, 0, 0], sizes = [2, 8, 8], strides = [1, 1, 1]} : vector<2x8x96xf32> to vector<2x8x8xf32>
    %16 = vector.extract_strided_slice %14 {offsets = [0, 0, 8], sizes = [2, 8, 8], strides = [1, 1, 1]} : vector<2x8x96xf32> to vector<2x8x8xf32>
    %17 = vector.extract_strided_slice %14 {offsets = [0, 0, 16], sizes = [2, 8, 8], strides = [1, 1, 1]} : vector<2x8x96xf32> to vector<2x8x8xf32>
    %18 = vector.extract_strided_slice %14 {offsets = [0, 0, 24], sizes = [2, 8, 8], strides = [1, 1, 1]} : vector<2x8x96xf32> to vector<2x8x8xf32>
    %19 = tpu.concatenate %15, %16, %17, %18 in 0 : vector<2x8x8xf32>, vector<2x8x8xf32>, vector<2x8x8xf32>, vector<2x8x8xf32> -> vector<8x8x8xf32>
    %20 = vector.extract_strided_slice %14 {offsets = [0, 0, 32], sizes = [2, 8, 8], strides = [1, 1, 1]} : vector<2x8x96xf32> to vector<2x8x8xf32>
    %21 = vector.extract_strided_slice %14 {offsets = [0, 0, 40], sizes = [2, 8, 8], strides = [1, 1, 1]} : vector<2x8x96xf32> to vector<2x8x8xf32>
    %22 = vector.extract_strided_slice %14 {offsets = [0, 0, 48], sizes = [2, 8, 8], strides = [1, 1, 1]} : vector<2x8x96xf32> to vector<2x8x8xf32>
    %23 = vector.extract_strided_slice %14 {offsets = [0, 0, 56], sizes = [2, 8, 8], strides = [1, 1, 1]} : vector<2x8x96xf32> to vector<2x8x8xf32>
    %24 = tpu.concatenate %20, %21, %22, %23 in 0 : vector<2x8x8xf32>, vector<2x8x8xf32>, vector<2x8x8xf32>, vector<2x8x8xf32> -> vector<8x8x8xf32>
    %25 = vector.extract_strided_slice %14 {offsets = [0, 0, 64], sizes = [2, 8, 8], strides = [1, 1, 1]} : vector<2x8x96xf32> to vector<2x8x8xf32>
    %26 = vector.extract_strided_slice %14 {offsets = [0, 0, 72], sizes = [2, 8, 8], strides = [1, 1, 1]} : vector<2x8x96xf32> to vector<2x8x8xf32>
    %27 = vector.extract_strided_slice %14 {offsets = [0, 0, 80], sizes = [2, 8, 8], strides = [1, 1, 1]} : vector<2x8x96xf32> to vector<2x8x8xf32>
    %28 = vector.extract_strided_slice %14 {offsets = [0, 0, 88], sizes = [2, 8, 8], strides = [1, 1, 1]} : vector<2x8x96xf32> to vector<2x8x8xf32>
    %29 = tpu.concatenate %25, %26, %27, %28 in 0 : vector<2x8x8xf32>, vector<2x8x8xf32>, vector<2x8x8xf32>, vector<2x8x8xf32> -> vector<8x8x8xf32>
    "tpu.trace_start"() <{level = 10 : i32, message = "bqd,bkd->bqk"}> : () -> ()
    %cst_5 = arith.constant dense<0.000000e+00> : vector<8x8x8xf32>
    %30 = tpu.matmul %19, %24, %cst_5 {dimension_numbers = #tpu.dot_dimension_numbers<[2], [2], [1], [1], [0, 0, 0, 1, 1, 1], [0], [0]>} : vector<8x8x8xf32>, vector<8x8x8xf32>, vector<8x8x8xf32> -> vector<8x8x8xf32>
    "tpu.trace_stop"() : () -> ()
    %cst_6 = arith.constant 0.353553385 : f32
    %31 = vector.broadcast %cst_6 : f32 to vector<8x8x8xf32>
    %32 = arith.mulf %30, %31 : vector<8x8x8xf32>
    %cst_7 = arith.constant dense<0xFF800000> : vector<8x8xf32>
    %33 = vector.multi_reduction <maximumf>, %32, %cst_7 [2] : vector<8x8x8xf32> to vector<8x8xf32>
    %34 = vector.shape_cast %33 : vector<8x8xf32> to vector<8x8x1xf32>
    %35 = vector.broadcast %34 : vector<8x8x1xf32> to vector<8x8x8xf32>
    %36 = arith.subf %32, %35 : vector<8x8x8xf32>
    %37 = math.exp %36 : vector<8x8x8xf32>
    %cst_8 = arith.constant dense<0.000000e+00> : vector<8x8xf32>
    %38 = vector.multi_reduction <add>, %37, %cst_8 [2] : vector<8x8x8xf32> to vector<8x8xf32>
    %39 = vector.shape_cast %38 : vector<8x8xf32> to vector<8x8x1xf32>
    %40 = tpu.reciprocal %39 {approx = true} : vector<8x8x1xf32> -> vector<8x8x1xf32>
    %41 = vector.broadcast %40 : vector<8x8x1xf32> to vector<8x8x8xf32>
    %42 = arith.mulf %37, %41 : vector<8x8x8xf32>
    "tpu.trace_start"() <{level = 10 : i32, message = "bqk,bkd->bqd"}> : () -> ()
    %cst_9 = arith.constant dense<0.000000e+00> : vector<8x8x8xf32>
    %43 = tpu.matmul %42, %29, %cst_9 {dimension_numbers = #tpu.dot_dimension_numbers<[2], [1], [1], [2], [0, 0, 0, 1, 1, 2], [0], [0]>} : vector<8x8x8xf32>, vector<8x8x8xf32>, vector<8x8x8xf32> -> vector<8x8x8xf32>
    "tpu.trace_stop"() : () -> ()
    %c0_10 = arith.constant 0 : index
    %c0_11 = arith.constant 0 : index
    %c0_12 = arith.constant 0 : index
    %44 = vector.load %arg2[%c0_10, %c0_11, %c0_12] : memref<8x8x32xf32, #tpu.memory_space<vmem>>, vector<8x8x32xf32>
    "tpu.trace_start"() <{level = 10 : i32, message = "bsd,bdm->bsm"}> : () -> ()
    %cst_13 = arith.constant dense<0.000000e+00> : vector<8x8x32xf32>
    %45 = tpu.matmul %43, %44, %cst_13 {dimension_numbers = #tpu.dot_dimension_numbers<[2], [1], [1], [2], [0, 0, 0, 1, 1, 2], [0], [0]>} : vector<8x8x8xf32>, vector<8x8x32xf32>, vector<8x8x32xf32> -> vector<8x8x32xf32>
    "tpu.trace_stop"() : () -> ()
    %46 = vector.extract_strided_slice %45 {offsets = [0, 0, 0], sizes = [2, 8, 32], strides = [1, 1, 1]} : vector<8x8x32xf32> to vector<2x8x32xf32>
    %47 = vector.extract_strided_slice %45 {offsets = [2, 0, 0], sizes = [2, 8, 32], strides = [1, 1, 1]} : vector<8x8x32xf32> to vector<2x8x32xf32>
    %48 = arith.addf %46, %47 : vector<2x8x32xf32>
    %49 = vector.extract_strided_slice %45 {offsets = [4, 0, 0], sizes = [2, 8, 32], strides = [1, 1, 1]} : vector<8x8x32xf32> to vector<2x8x32xf32>
    %50 = arith.addf %48, %49 : vector<2x8x32xf32>
    %51 = vector.extract_strided_slice %45 {offsets = [6, 0, 0], sizes = [2, 8, 32], strides = [1, 1, 1]} : vector<8x8x32xf32> to vector<2x8x32xf32>
    %52 = arith.addf %50, %51 : vector<2x8x32xf32>
    %53 = vector.shape_cast %52 : vector<2x8x32xf32> to vector<16x32xf32>
    %54 = vector.broadcast %4 : vector<1x32xf32> to vector<16x32xf32>
    %55 = arith.addf %53, %54 : vector<16x32xf32>
    %56 = arith.addf %0, %55 : vector<16x32xf32>
    %cst_14 = arith.constant dense<0.000000e+00> : vector<16xf32>
    %57 = vector.multi_reduction <add>, %56, %cst_14 [1] : vector<16x32xf32> to vector<16xf32>
    %58 = vector.shape_cast %57 : vector<16xf32> to vector<16x1xf32>
    %cst_15 = arith.constant 3.200000e+01 : f32
    %59 = vector.broadcast %cst_15 : f32 to vector<16x1xf32>
    %60 = arith.divf %58, %59 : vector<16x1xf32>
    %61 = vector.broadcast %60 : vector<16x1xf32> to vector<16x32xf32>
    %62 = arith.subf %56, %61 : vector<16x32xf32>
    %63 = arith.mulf %62, %62 : vector<16x32xf32>
    %cst_16 = arith.constant dense<0.000000e+00> : vector<16xf32>
    %64 = vector.multi_reduction <add>, %63, %cst_16 [1] : vector<16x32xf32> to vector<16xf32>
    %65 = vector.shape_cast %64 : vector<16xf32> to vector<16x1xf32>
    %cst_17 = arith.constant 3.200000e+01 : f32
    %66 = vector.broadcast %cst_17 : f32 to vector<16x1xf32>
    %67 = arith.divf %65, %66 : vector<16x1xf32>
    %68 = vector.broadcast %60 : vector<16x1xf32> to vector<16x32xf32>
    %69 = arith.subf %56, %68 : vector<16x32xf32>
    %cst_18 = arith.constant 9.99999974E-6 : f32
    %70 = vector.broadcast %cst_18 : f32 to vector<16x1xf32>
    %71 = arith.addf %67, %70 : vector<16x1xf32>
    %72 = math.rsqrt %71 : vector<16x1xf32>
    %73 = vector.broadcast %72 : vector<16x1xf32> to vector<16x32xf32>
    %74 = arith.mulf %69, %73 : vector<16x32xf32>
    %75 = vector.broadcast %5 : vector<1x32xf32> to vector<16x32xf32>
    %76 = arith.mulf %74, %75 : vector<16x32xf32>
    %77 = vector.broadcast %6 : vector<1x32xf32> to vector<16x32xf32>
    %78 = arith.addf %76, %77 : vector<16x32xf32>
    %c0_19 = arith.constant 0 : index
    %c0_20 = arith.constant 0 : index
    %79 = vector.load %arg3[%c0_19, %c0_20] : memref<32x64xf32, #tpu.memory_space<vmem>>, vector<32x64xf32>
    %cst_21 = arith.constant dense<0.000000e+00> : vector<16x64xf32>
    %80 = tpu.matmul %78, %79, %cst_21 {dimension_numbers = #tpu.dot_dimension_numbers<[1], [0], [0], [1], [0, 0, 1, 1], [], []>} : vector<16x32xf32>, vector<32x64xf32>, vector<16x64xf32> -> vector<16x64xf32>
    %81 = vector.broadcast %3 : vector<1x64xf32> to vector<16x64xf32>
    %82 = arith.addf %80, %81 : vector<16x64xf32>
    %cst_22 = arith.constant 0.000000e+00 : f32
    %83 = vector.broadcast %cst_22 : f32 to vector<16x64xf32>
    %84 = arith.maximumf %82, %83 : vector<16x64xf32>
    %c0_23 = arith.constant 0 : index
    %c0_24 = arith.constant 0 : index
    %85 = vector.load %arg4[%c0_23, %c0_24] : memref<64x32xf32, #tpu.memory_space<vmem>>, vector<64x32xf32>
    %cst_25 = arith.constant dense<0.000000e+00> : vector<16x32xf32>
    %86 = tpu.matmul %84, %85, %cst_25 {dimension_numbers = #tpu.dot_dimension_numbers<[1], [0], [0], [1], [0, 0, 1, 1], [], []>} : vector<16x64xf32>, vector<64x32xf32>, vector<16x32xf32> -> vector<16x32xf32>
    %87 = vector.broadcast %7 : vector<1x32xf32> to vector<16x32xf32>
    %88 = arith.addf %86, %87 : vector<16x32xf32>
    %89 = arith.addf %78, %88 : vector<16x32xf32>
    %cst_26 = arith.constant dense<0.000000e+00> : vector<16xf32>
    %90 = vector.multi_reduction <add>, %89, %cst_26 [1] : vector<16x32xf32> to vector<16xf32>
    %91 = vector.shape_cast %90 : vector<16xf32> to vector<16x1xf32>
    %cst_27 = arith.constant 3.200000e+01 : f32
    %92 = vector.broadcast %cst_27 : f32 to vector<16x1xf32>
    %93 = arith.divf %91, %92 : vector<16x1xf32>
    %94 = vector.broadcast %93 : vector<16x1xf32> to vector<16x32xf32>
    %95 = arith.subf %89, %94 : vector<16x32xf32>
    %96 = arith.mulf %95, %95 : vector<16x32xf32>
    %cst_28 = arith.constant dense<0.000000e+00> : vector<16xf32>
    %97 = vector.multi_reduction <add>, %96, %cst_28 [1] : vector<16x32xf32> to vector<16xf32>
    %98 = vector.shape_cast %97 : vector<16xf32> to vector<16x1xf32>
    %cst_29 = arith.constant 3.200000e+01 : f32
    %99 = vector.broadcast %cst_29 : f32 to vector<16x1xf32>
    %100 = arith.divf %98, %99 : vector<16x1xf32>
    %101 = vector.broadcast %93 : vector<16x1xf32> to vector<16x32xf32>
    %102 = arith.subf %89, %101 : vector<16x32xf32>
    %cst_30 = arith.constant 9.99999974E-6 : f32
    %103 = vector.broadcast %cst_30 : f32 to vector<16x1xf32>
    %104 = arith.addf %100, %103 : vector<16x1xf32>
    %105 = math.rsqrt %104 : vector<16x1xf32>
    %106 = vector.broadcast %105 : vector<16x1xf32> to vector<16x32xf32>
    %107 = arith.mulf %102, %106 : vector<16x32xf32>
    %108 = vector.broadcast %8 : vector<1x32xf32> to vector<16x32xf32>
    %109 = arith.mulf %107, %108 : vector<16x32xf32>
    %110 = vector.broadcast %9 : vector<1x32xf32> to vector<16x32xf32>
    %111 = arith.addf %109, %110 : vector<16x32xf32>
    %c0_31 = arith.constant 0 : index
    %c0_32 = arith.constant 0 : index
    %112 = vector.load %arg6[%c0_31, %c0_32] : memref<16x32xf32, #tpu.memory_space<vmem>>, vector<16x32xf32>
    tpu.vector_store %arg6[%c0_31, %c0_32], %111 {strides = array<i32>} : memref<16x32xf32, #tpu.memory_space<vmem>>, vector<16x32xf32>,
    return
  }
}

</mosaic_0001>

<llo_original>
// kernel: tpu_custom_call.1
$region0: #{tpu_custom_call.1}
  #allocation0 [shape = 'u32[]', space=smem, size = 0x4, offset = 0x4, fixed_abs, tag = 'smem constant byte address 0x4 - core index']
  #allocation1 [shape = 'u32[144,128]{1,0:T(1,128)}', space=vmem, size = 0x12000, scoped, tag = 'internal scratch']
  %s0 = inlined_call_operand.hbm [shape: f32[16,32], index: 0, kind: input, shape index: {}]
  %s1 = inlined_call_operand.vmem [shape: f32[32,96], index: 1, kind: input, shape index: {}]
  %s2 = inlined_call_operand.vmem [shape: f32[8,8,32], index: 2, kind: input, shape index: {}]
  %s3 = inlined_call_operand.hbm [shape: f32[32,64], index: 3, kind: input, shape index: {}]
  %s4 = inlined_call_operand.vmem [shape: f32[64,32], index: 4, kind: input, shape index: {}]
  %s5 = inlined_call_operand.vmem [shape: f32[8,96], index: 5, kind: input, shape index: {}]
  %s6 = inlined_call_operand.hbm [shape: f32[16,32], index: 6, kind: output, shape index: {}]
  %s7 = sld [smem:[#allocation0]]
  $region42: #{tpu_custom_call.1} parent=0
    _
  %s9 = ssub.s32 1, %s7
  %s10 = scalar_select 0, %s9, %s7
  $region1: #{tpu_custom_call.1} parent=0
    #allocation2 [shape = 'u8[8192]{0}', space=vmem, size = 0x2000, scoped, tag = 'input window, operand 0, single buffered']
    #allocation3 [shape = 's32[1]{0}', space=sflag, size = 0x4, scoped, tag = 'scoped memory for tpu_custom_call.1']
    #allocation4 [shape = 's32[1]{0}', space=sflag, size = 0x4, scoped, tag = 'scoped memory for tpu_custom_call.1']
    #allocation5 [shape = 'u8[16384]{0}', space=vmem, size = 0x4000, scoped, tag = 'input window, operand 3, single buffered']
    #allocation6 [shape = 's32[1]{0}', space=sflag, size = 0x4, scoped, tag = 'scoped memory for tpu_custom_call.1']
    #allocation7 [shape = 'u8[8192]{0}', space=vmem, size = 0x2000, scoped, tag = 'output window, operand 0, single buffered']
    %11 = vsyncpa [#allocation3], 0
    %12 = vsyncpa [#allocation6], 0
    %13 = vsyncpa [#allocation4], 0
    // Predicated region
    $region2: #{tpu_custom_call.1} parent=1 // pred_check
      _
    $region3: #{tpu_custom_call.1} parent=1 // pred_check_branch
      %15 = sbr.rel (0) target = $region5
    $region4: #{tpu_custom_call.1} parent=1 // pred_region
      %s17 = ssub.s32 256, 256
      %18 = vsyncadd [#allocation3], %s17
      %s19 = sshll.u32 [#allocation2], 4
      %s20 = int_to_ptr.vmem [resolvable:$true] %s19
      %25 = dma.hbm_to_vmem [thread:$0]  %s0, 256, %s20, [#allocation3], 128, 128, 8
    $region5: #{tpu_custom_call.1} parent=1 // pred_fallthru
      _
    // Predicated region
    $region6: #{tpu_custom_call.1} parent=1 // pred_check
      _
    $region7: #{tpu_custom_call.1} parent=1 // pred_check_branch
      %27 = sbr.rel (0) target = $region9
    $region8: #{tpu_custom_call.1} parent=1 // pred_region
      _
    $region9: #{tpu_custom_call.1} parent=1 // pred_fallthru
      _
    // Predicated region
    $region10: #{tpu_custom_call.1} parent=1 // pred_check
      _
    $region11: #{tpu_custom_call.1} parent=1 // pred_check_branch
      %29 = sbr.rel (0) target = $region13
    $region12: #{tpu_custom_call.1} parent=1 // pred_region
      _
    $region13: #{tpu_custom_call.1} parent=1 // pred_fallthru
      _
    // Predicated region
    $region14: #{tpu_custom_call.1} parent=1 // pred_check
      _
    $region15: #{tpu_custom_call.1} parent=1 // pred_check_branch
      %31 = sbr.rel (0) target = $region17
    $region16: #{tpu_custom_call.1} parent=1 // pred_region
      %s33 = ssub.s32 512, 512
      %34 = vsyncadd [#allocation6], %s33
      %s35 = sshll.u32 [#allocation5], 4
      %s36 = int_to_ptr.vmem [resolvable:$true] %s35
      %41 = dma.hbm_to_vmem [thread:$0]  %s3, 512, %s36, [#allocation6], 128, 128, 8
    $region17: #{tpu_custom_call.1} parent=1 // pred_fallthru
      _
    // Predicated region
    $region18: #{tpu_custom_call.1} parent=1 // pred_check
      _
    $region19: #{tpu_custom_call.1} parent=1 // pred_check_branch
      %43 = sbr.rel (0) target = $region21
    $region20: #{tpu_custom_call.1} parent=1 // pred_region
      _
    $region21: #{tpu_custom_call.1} parent=1 // pred_fallthru
      _
    // Predicated region
    $region22: #{tpu_custom_call.1} parent=1 // pred_check
      _
    $region23: #{tpu_custom_call.1} parent=1 // pred_check_branch
      %45 = sbr.rel (0) target = $region25
    $region24: #{tpu_custom_call.1} parent=1 // pred_region
      _
    $region25: #{tpu_custom_call.1} parent=1 // pred_fallthru
      _
    // Predicated region
    $region26: #{tpu_custom_call.1} parent=1 // pred_check
      _
    $region27: #{tpu_custom_call.1} parent=1 // pred_check_branch
      %47 = sbr.rel (0) target = $region29
    $region28: #{tpu_custom_call.1} parent=1 // pred_region
      %48 = dma.done [#allocation3], 256
    $region29: #{tpu_custom_call.1} parent=1 // pred_fallthru
      _
    // Predicated region
    $region30: #{tpu_custom_call.1} parent=1 // pred_check
      _
    $region31: #{tpu_custom_call.1} parent=1 // pred_check_branch
      %50 = sbr.rel (0) target = $region33
    $region32: #{tpu_custom_call.1} parent=1 // pred_region
      %51 = dma.done [#allocation6], 512
    $region33: #{tpu_custom_call.1} parent=1 // pred_fallthru
      _
    %v52 = vld [vmem:[#allocation2] sm:$0xff]
    %v53 = vld [vmem:[#allocation2 + $0x8] sm:$0xff]
    %v54 = vld [vmem:[%s5] sm:$0xff]
    %v55 = vld [vmem:[%s1] sm:$0xff]
    %v56 = vld [vmem:[%s1 + $0x8] sm:$0xff]
    %v57 = vld [vmem:[%s1 + $0x10] sm:$0xff]
    %v58 = vld [vmem:[%s1 + $0x18] sm:$0xff]
    %v59 = vlaneseq
    %v60 = vshrl.u32 %v59, 7
    %v61 = vsub.s32 0, %v60
    %v62 = vrot.slane %v54, %v61
    %vm63 = vcmask 261120
    %v65 = vsel %vm63, %v52, 0
    %v68 = vsel %vm63, %v53, 0
    %70 = vmatprep.subr.mxu0 0.0
    %71 = vmatpush1.msra.mxu0 0.0
    %72 = vmatprep.subr.mxu0 0.0
    %73 = vmatpush1.msra.mxu0 0.0
    %74 = vmatprep.subr.mxu0 0.0
    %75 = vmatpush1.msra.mxu0 0.0
    %76 = vmatprep.subr.mxu0 0.0
    %77 = vmatpush1.msra.mxu0 0.0
    %78 = vmatprep.subr.mxu0 0.0
    %79 = vmatpush1.msra.mxu0 0.0
    %80 = vmatprep.subr.mxu0 0.0
    %81 = vmatpush1.msra.mxu0 0.0
    %82 = vmatprep.subr.mxu0 0.0
    %83 = vmatpush1.msra.mxu0 0.0
    %84 = vmatprep.subr.mxu0 0.0
    %85 = vmatpush1.msra.mxu0 0.0
    %86 = vmatprep.subr.mxu0 0.0
    %87 = vmatpush1.msra.mxu0 0.0
    %88 = vmatprep.subr.mxu0 0.0
    %89 = vmatpush1.msra.mxu0 0.0
    %90 = vmatprep.subr.mxu0 0.0
    %91 = vmatpush1.msra.mxu0 0.0
    %92 = vmatprep.subr.mxu0 0.0
    %93 = vmatpush1.msra.mxu0 0.0
    %94 = vmatprep.subr.mxu0 0.0
    %95 = vmatpush1.msra.mxu0 %v58
    %96 = vmatprep.subr.mxu0 0.0
    %97 = vmatpush1.msra.mxu0 %v57
    %98 = vmatprep.subr.mxu0 0.0
    %99 = vmatpush1.msra.mxu0 %v56
    %100 = vmatprep.subr.mxu0 0.0
    %101 = vmatpush1.msra.mxu0 %v55
    %102 = vmatprep.subr.mxu0 0.0
    %103 = vmatpush2.msra.mxu0 0.0
    %104 = vmatprep.subr.mxu0 0.0
    %105 = vmatpush2.msra.mxu0 0.0
    %106 = vmatprep.subr.mxu0 0.0
    %107 = vmatpush2.msra.mxu0 0.0
    %108 = vmatprep.subr.mxu0 0.0
    %109 = vmatpush2.msra.mxu0 0.0
    %110 = vmatprep.subr.mxu0 0.0
    %111 = vmatpush2.msra.mxu0 0.0
    %112 = vmatprep.subr.mxu0 0.0
    %113 = vmatpush2.msra.mxu0 0.0
    %114 = vmatprep.subr.mxu0 0.0
    %115 = vmatpush2.msra.mxu0 0.0
    %116 = vmatprep.subr.mxu0 0.0
    %117 = vmatpush2.msra.mxu0 0.0
    %118 = vmatprep.subr.mxu0 0.0
    %119 = vmatpush2.msra.mxu0 0.0
    %120 = vmatprep.subr.mxu0 0.0
    %121 = vmatpush2.msra.mxu0 0.0
    %122 = vmatprep.subr.mxu0 0.0
    %123 = vmatpush2.msra.mxu0 0.0
    %124 = vmatprep.subr.mxu0 0.0
    %125 = vmatpush2.msra.mxu0 0.0
    %126 = vmatprep.subr.mxu0 0.0
    %127 = vmatpush2.msra.mxu0 0.0
    %128 = vmatprep.subr.mxu0 0.0
    %129 = vmatpush2.msra.mxu0 0.0
    %130 = vmatprep.subr.mxu0 0.0
    %131 = vmatpush2.msra.mxu0 0.0
    %132 = vmatprep.subr.mxu0 0.0
    %133 = vmatpush2.msra.mxu0 0.0
    %134 = vmatprep.mubr.f32.mxu0 0.0
    %135 = vmatmul.mubr.f32.gmra.mxu0 %v65
    %v136 = vpop.f32.mrf.mxu0
    %v137 = vadd.f32 %v62, %v136
    %v138 = vpop.f32.mrf.mxu0
    %139 = vmatprep.mubr.f32.mxu0 0.0
    %140 = vmatmul.mubr.f32.gmra.mxu0 %v68
    %v141 = vpop.f32.mrf.mxu0
    %v142 = vadd.f32 %v62, %v141
    %v143 = vpop.f32.mrf.mxu0
    %144 = vdwg.mxu0
    %147 = vrot.lane.b32.xlu0 %v137, 120
    %v148 = vpop.permute.xlu0 %147
    %149 = vrot.lane.b32.xlu0 %v142, 120
    %v150 = vpop.permute.xlu0 %149
    %151 = vrot.lane.b32.xlu0 %v137, 112
    %v152 = vpop.permute.xlu0 %151
    %153 = vrot.lane.b32.xlu0 %v142, 112
    %v154 = vpop.permute.xlu0 %153
    %155 = vrot.lane.b32.xlu0 %v137, 104
    %v156 = vpop.permute.xlu0 %155
    %157 = vrot.lane.b32.xlu0 %v142, 104
    %v158 = vpop.permute.xlu0 %157
    %159 = vrot.lane.b32.xlu0 %v137, 96
    %v160 = vpop.permute.xlu0 %159
    %vm161 = vcmask 64512
    %v162 = vsel %vm161, %v137, 0
    %v164 = vsel %vm161, %v160, 0
    %166 = vmatprep.subr.mxu0 0.0
    %167 = vmatpush1.xpose.msra.mxu0 0.0
    %168 = vmatprep.subr.mxu0 0.0
    %169 = vmatpush1.xpose.msra.mxu0 0.0
    %170 = vmatprep.subr.mxu0 0.0
    %171 = vmatpush1.xpose.msra.mxu0 0.0
    %172 = vmatprep.subr.mxu0 0.0
    %173 = vmatpush1.xpose.msra.mxu0 0.0
    %174 = vmatprep.subr.mxu0 0.0
    %175 = vmatpush1.xpose.msra.mxu0 0.0
    %176 = vmatprep.subr.mxu0 0.0
    %177 = vmatpush1.xpose.msra.mxu0 0.0
    %178 = vmatprep.subr.mxu0 0.0
    %179 = vmatpush1.xpose.msra.mxu0 0.0
    %180 = vmatprep.subr.mxu0 0.0
    %181 = vmatpush1.xpose.msra.mxu0 0.0
    %182 = vmatprep.subr.mxu0 0.0
    %183 = vmatpush1.xpose.msra.mxu0 0.0
    %184 = vmatprep.subr.mxu0 0.0
    %185 = vmatpush1.xpose.msra.mxu0 0.0
    %186 = vmatprep.subr.mxu0 0.0
    %187 = vmatpush1.xpose.msra.mxu0 0.0
    %188 = vmatprep.subr.mxu0 0.0
    %189 = vmatpush1.xpose.msra.mxu0 0.0
    %190 = vmatprep.subr.mxu0 0.0
    %191 = vmatpush1.xpose.msra.mxu0 0.0
    %192 = vmatprep.subr.mxu0 0.0
    %193 = vmatpush1.xpose.msra.mxu0 0.0
    %194 = vmatprep.subr.mxu0 0.0
    %195 = vmatpush1.xpose.msra.mxu0 0.0
    %196 = vmatprep.subr.mxu0 0.0
    %197 = vmatpush1.xpose.msra.mxu0 %v164
    %198 = vmatprep.subr.mxu0 0.0
    %199 = vmatpush2.xpose.msra.mxu0 0.0
    %200 = vmatprep.subr.mxu0 0.0
    %201 = vmatpush2.xpose.msra.mxu0 0.0
    %202 = vmatprep.subr.mxu0 0.0
    %203 = vmatpush2.xpose.msra.mxu0 0.0
    %204 = vmatprep.subr.mxu0 0.0
    %205 = vmatpush2.xpose.msra.mxu0 0.0
    %206 = vmatprep.subr.mxu0 0.0
    %207 = vmatpush2.xpose.msra.mxu0 0.0
    %208 = vmatprep.subr.mxu0 0.0
    %209 = vmatpush2.xpose.msra.mxu0 0.0
    %210 = vmatprep.subr.mxu0 0.0
    %211 = vmatpush2.xpose.msra.mxu0 0.0
    %212 = vmatprep.subr.mxu0 0.0
    %213 = vmatpush2.xpose.msra.mxu0 0.0
    %214 = vmatprep.subr.mxu0 0.0
    %215 = vmatpush2.xpose.msra.mxu0 0.0
    %216 = vmatprep.subr.mxu0 0.0
    %217 = vmatpush2.xpose.msra.mxu0 0.0
    %218 = vmatprep.subr.mxu0 0.0
    %219 = vmatpush2.xpose.msra.mxu0 0.0
    %220 = vmatprep.subr.mxu0 0.0
    %221 = vmatpush2.xpose.msra.mxu0 0.0
    %222 = vmatprep.subr.mxu0 0.0
    %223 = vmatpush2.xpose.msra.mxu0 0.0
    %224 = vmatprep.subr.mxu0 0.0
    %225 = vmatpush2.xpose.msra.mxu0 0.0
    %226 = vmatprep.subr.mxu0 0.0
    %227 = vmatpush2.xpose.msra.mxu0 0.0
    %228 = vmatprep.subr.mxu0 0.0
    %229 = vmatpush2.xpose.msra.mxu0 0.0
    %230 = vmatprep.mubr.f32.mxu0 0.0
    %231 = vmatmul.mubr.f32.gmra.mxu0 %v162
    %v232 = vpop.f32.mrf.mxu0
    %v233 = vadd.f32 0.0, %v232
    %v234 = vpop.f32.mrf.mxu0
    %235 = vdwg.mxu0
    %236 = vrot.lane.b32.xlu0 %v142, 96
    %v237 = vpop.permute.xlu0 %236
    %v238 = vsel %vm161, %v142, 0
    %v240 = vsel %vm161, %v237, 0
    %242 = vmatprep.subr.mxu0 0.0
    %243 = vmatpush1.xpose.msra.mxu0 0.0
    %244 = vmatprep.subr.mxu0 0.0
    %245 = vmatpush1.xpose.msra.mxu0 0.0
    %246 = vmatprep.subr.mxu0 0.0
    %247 = vmatpush1.xpose.msra.mxu0 0.0
    %248 = vmatprep.subr.mxu0 0.0
    %249 = vmatpush1.xpose.msra.mxu0 0.0
    %250 = vmatprep.subr.mxu0 0.0
    %251 = vmatpush1.xpose.msra.mxu0 0.0
    %252 = vmatprep.subr.mxu0 0.0
    %253 = vmatpush1.xpose.msra.mxu0 0.0
    %254 = vmatprep.subr.mxu0 0.0
    %255 = vmatpush1.xpose.msra.mxu0 0.0
    %256 = vmatprep.subr.mxu0 0.0
    %257 = vmatpush1.xpose.msra.mxu0 0.0
    %258 = vmatprep.subr.mxu0 0.0
    %259 = vmatpush1.xpose.msra.mxu0 0.0
    %260 = vmatprep.subr.mxu0 0.0
    %261 = vmatpush1.xpose.msra.mxu0 0.0
    %262 = vmatprep.subr.mxu0 0.0
    %263 = vmatpush1.xpose.msra.mxu0 0.0
    %264 = vmatprep.subr.mxu0 0.0
    %265 = vmatpush1.xpose.msra.mxu0 0.0
    %266 = vmatprep.subr.mxu0 0.0
    %267 = vmatpush1.xpose.msra.mxu0 0.0
    %268 = vmatprep.subr.mxu0 0.0
    %269 = vmatpush1.xpose.msra.mxu0 0.0
    %270 = vmatprep.subr.mxu0 0.0
    %271 = vmatpush1.xpose.msra.mxu0 0.0
    %272 = vmatprep.subr.mxu0 0.0
    %273 = vmatpush1.xpose.msra.mxu0 %v240
    %274 = vmatprep.subr.mxu0 0.0
    %275 = vmatpush2.xpose.msra.mxu0 0.0
    %276 = vmatprep.subr.mxu0 0.0
    %277 = vmatpush2.xpose.msra.mxu0 0.0
    %278 = vmatprep.subr.mxu0 0.0
    %279 = vmatpush2.xpose.msra.mxu0 0.0
    %280 = vmatprep.subr.mxu0 0.0
    %281 = vmatpush2.xpose.msra.mxu0 0.0
    %282 = vmatprep.subr.mxu0 0.0
    %283 = vmatpush2.xpose.msra.mxu0 0.0
    %284 = vmatprep.subr.mxu0 0.0
    %285 = vmatpush2.xpose.msra.mxu0 0.0
    %286 = vmatprep.subr.mxu0 0.0
    %287 = vmatpush2.xpose.msra.mxu0 0.0
    %288 = vmatprep.subr.mxu0 0.0
    %289 = vmatpush2.xpose.msra.mxu0 0.0
    %290 = vmatprep.subr.mxu0 0.0
    %291 = vmatpush2.xpose.msra.mxu0 0.0
    %292 = vmatprep.subr.mxu0 0.0
    %293 = vmatpush2.xpose.msra.mxu0 0.0
    %294 = vmatprep.subr.mxu0 0.0
    %295 = vmatpush2.xpose.msra.mxu0 0.0
    %296 = vmatprep.subr.mxu0 0.0
    %297 = vmatpush2.xpose.msra.mxu0 0.0
    %298 = vmatprep.subr.mxu0 0.0
    %299 = vmatpush2.xpose.msra.mxu0 0.0
    %300 = vmatprep.subr.mxu0 0.0
    %301 = vmatpush2.xpose.msra.mxu0 0.0
    %302 = vmatprep.subr.mxu0 0.0
    %303 = vmatpush2.xpose.msra.mxu0 0.0
    %304 = vmatprep.subr.mxu0 0.0
    %305 = vmatpush2.xpose.msra.mxu0 0.0
    %306 = vmatprep.mubr.f32.mxu0 0.0
    %307 = vmatmul.mubr.f32.gmra.mxu0 %v238
    %v308 = vpop.f32.mrf.mxu0
    %v309 = vadd.f32 0.0, %v308
    %v310 = vpop.f32.mrf.mxu0
    %311 = vdwg.mxu0
    %312 = vrot.lane.b32.xlu0 %v148, 96
    %v313 = vpop.permute.xlu0 %312
    %v314 = vsel %vm161, %v148, 0
    %v316 = vsel %vm161, %v313, 0
    %318 = vmatprep.subr.mxu0 0.0
    %319 = vmatpush1.xpose.msra.mxu0 0.0
    %320 = vmatprep.subr.mxu0 0.0
    %321 = vmatpush1.xpose.msra.mxu0 0.0
    %322 = vmatprep.subr.mxu0 0.0
    %323 = vmatpush1.xpose.msra.mxu0 0.0
    %324 = vmatprep.subr.mxu0 0.0
    %325 = vmatpush1.xpose.msra.mxu0 0.0
    %326 = vmatprep.subr.mxu0 0.0
    %327 = vmatpush1.xpose.msra.mxu0 0.0
    %328 = vmatprep.subr.mxu0 0.0
    %329 = vmatpush1.xpose.msra.mxu0 0.0
    %330 = vmatprep.subr.mxu0 0.0
    %331 = vmatpush1.xpose.msra.mxu0 0.0
    %332 = vmatprep.subr.mxu0 0.0
    %333 = vmatpush1.xpose.msra.mxu0 0.0
    %334 = vmatprep.subr.mxu0 0.0
    %335 = vmatpush1.xpose.msra.mxu0 0.0
    %336 = vmatprep.subr.mxu0 0.0
    %337 = vmatpush1.xpose.msra.mxu0 0.0
    %338 = vmatprep.subr.mxu0 0.0
    %339 = vmatpush1.xpose.msra.mxu0 0.0
    %340 = vmatprep.subr.mxu0 0.0
    %341 = vmatpush1.xpose.msra.mxu0 0.0
    %342 = vmatprep.subr.mxu0 0.0
    %343 = vmatpush1.xpose.msra.mxu0 0.0
    %344 = vmatprep.subr.mxu0 0.0
    %345 = vmatpush1.xpose.msra.mxu0 0.0
    %346 = vmatprep.subr.mxu0 0.0
    %347 = vmatpush1.xpose.msra.mxu0 0.0
    %348 = vmatprep.subr.mxu0 0.0
    %349 = vmatpush1.xpose.msra.mxu0 %v316
    %350 = vmatprep.subr.mxu0 0.0
    %351 = vmatpush2.xpose.msra.mxu0 0.0
    %352 = vmatprep.subr.mxu0 0.0
    %353 = vmatpush2.xpose.msra.mxu0 0.0
    %354 = vmatprep.subr.mxu0 0.0
    %355 = vmatpush2.xpose.msra.mxu0 0.0
    %356 = vmatprep.subr.mxu0 0.0
    %357 = vmatpush2.xpose.msra.mxu0 0.0
    %358 = vmatprep.subr.mxu0 0.0
    %359 = vmatpush2.xpose.msra.mxu0 0.0
    %360 = vmatprep.subr.mxu0 0.0
    %361 = vmatpush2.xpose.msra.mxu0 0.0
    %362 = vmatprep.subr.mxu0 0.0
    %363 = vmatpush2.xpose.msra.mxu0 0.0
    %364 = vmatprep.subr.mxu0 0.0
    %365 = vmatpush2.xpose.msra.mxu0 0.0
    %366 = vmatprep.subr.mxu0 0.0
    %367 = vmatpush2.xpose.msra.mxu0 0.0
    %368 = vmatprep.subr.mxu0 0.0
    %369 = vmatpush2.xpose.msra.mxu0 0.0
    %370 = vmatprep.subr.mxu0 0.0
    %371 = vmatpush2.xpose.msra.mxu0 0.0
    %372 = vmatprep.subr.mxu0 0.0
    %373 = vmatpush2.xpose.msra.mxu0 0.0
    %374 = vmatprep.subr.mxu0 0.0
    %375 = vmatpush2.xpose.msra.mxu0 0.0
    %376 = vmatprep.subr.mxu0 0.0
    %377 = vmatpush2.xpose.msra.mxu0 0.0
    %378 = vmatprep.subr.mxu0 0.0
    %379 = vmatpush2.xpose.msra.mxu0 0.0
    %380 = vmatprep.subr.mxu0 0.0
    %381 = vmatpush2.xpose.msra.mxu0 0.0
    %382 = vmatprep.mubr.f32.mxu0 0.0
    %383 = vmatmul.mubr.f32.gmra.mxu0 %v314
    %v384 = vpop.f32.mrf.mxu0
    %v385 = vadd.f32 0.0, %v384
    %v386 = vpop.f32.mrf.mxu0
    %387 = vdwg.mxu0
    %388 = vrot.lane.b32.xlu0 %v150, 96
    %v389 = vpop.permute.xlu0 %388
    %v390 = vsel %vm161, %v150, 0
    %v392 = vsel %vm161, %v389, 0
    %394 = vmatprep.subr.mxu0 0.0
    %395 = vmatpush1.xpose.msra.mxu0 0.0
    %396 = vmatprep.subr.mxu0 0.0
    %397 = vmatpush1.xpose.msra.mxu0 0.0
    %398 = vmatprep.subr.mxu0 0.0
    %399 = vmatpush1.xpose.msra.mxu0 0.0
    %400 = vmatprep.subr.mxu0 0.0
    %401 = vmatpush1.xpose.msra.mxu0 0.0
    %402 = vmatprep.subr.mxu0 0.0
    %403 = vmatpush1.xpose.msra.mxu0 0.0
    %404 = vmatprep.subr.mxu0 0.0
    %405 = vmatpush1.xpose.msra.mxu0 0.0
    %406 = vmatprep.subr.mxu0 0.0
    %407 = vmatpush1.xpose.msra.mxu0 0.0
    %408 = vmatprep.subr.mxu0 0.0
    %409 = vmatpush1.xpose.msra.mxu0 0.0
    %410 = vmatprep.subr.mxu0 0.0
    %411 = vmatpush1.xpose.msra.mxu0 0.0
    %412 = vmatprep.subr.mxu0 0.0
    %413 = vmatpush1.xpose.msra.mxu0 0.0
    %414 = vmatprep.subr.mxu0 0.0
    %415 = vmatpush1.xpose.msra.mxu0 0.0
    %416 = vmatprep.subr.mxu0 0.0
    %417 = vmatpush1.xpose.msra.mxu0 0.0
    %418 = vmatprep.subr.mxu0 0.0
    %419 = vmatpush1.xpose.msra.mxu0 0.0
    %420 = vmatprep.subr.mxu0 0.0
    %421 = vmatpush1.xpose.msra.mxu0 0.0
    %422 = vmatprep.subr.mxu0 0.0
    %423 = vmatpush1.xpose.msra.mxu0 0.0
    %424 = vmatprep.subr.mxu0 0.0
    %425 = vmatpush1.xpose.msra.mxu0 %v392
    %426 = vmatprep.subr.mxu0 0.0
    %427 = vmatpush2.xpose.msra.mxu0 0.0
    %428 = vmatprep.subr.mxu0 0.0
    %429 = vmatpush2.xpose.msra.mxu0 0.0
    %430 = vmatprep.subr.mxu0 0.0
    %431 = vmatpush2.xpose.msra.mxu0 0.0
    %432 = vmatprep.subr.mxu0 0.0
    %433 = vmatpush2.xpose.msra.mxu0 0.0
    %434 = vmatprep.subr.mxu0 0.0
    %435 = vmatpush2.xpose.msra.mxu0 0.0
    %436 = vmatprep.subr.mxu0 0.0
    %437 = vmatpush2.xpose.msra.mxu0 0.0
    %438 = vmatprep.subr.mxu0 0.0
    %439 = vmatpush2.xpose.msra.mxu0 0.0
    %440 = vmatprep.subr.mxu0 0.0
    %441 = vmatpush2.xpose.msra.mxu0 0.0
    %442 = vmatprep.subr.mxu0 0.0
    %443 = vmatpush2.xpose.msra.mxu0 0.0
    %444 = vmatprep.subr.mxu0 0.0
    %445 = vmatpush2.xpose.msra.mxu0 0.0
    %446 = vmatprep.subr.mxu0 0.0
    %447 = vmatpush2.xpose.msra.mxu0 0.0
    %448 = vmatprep.subr.mxu0 0.0
    %449 = vmatpush2.xpose.msra.mxu0 0.0
    %450 = vmatprep.subr.mxu0 0.0
    %451 = vmatpush2.xpose.msra.mxu0 0.0
    %452 = vmatprep.subr.mxu0 0.0
    %453 = vmatpush2.xpose.msra.mxu0 0.0
    %454 = vmatprep.subr.mxu0 0.0
    %455 = vmatpush2.xpose.msra.mxu0 0.0
    %456 = vmatprep.subr.mxu0 0.0
    %457 = vmatpush2.xpose.msra.mxu0 0.0
    %458 = vmatprep.mubr.f32.mxu0 0.0
    %459 = vmatmul.mubr.f32.gmra.mxu0 %v390
    %v460 = vpop.f32.mrf.mxu0
    %v461 = vadd.f32 0.0, %v460
    %v462 = vpop.f32.mrf.mxu0
    %463 = vdwg.mxu0
    %464 = vrot.lane.b32.xlu0 %v152, 96
    %v465 = vpop.permute.xlu0 %464
    %v466 = vsel %vm161, %v152, 0
    %v468 = vsel %vm161, %v465, 0
    %470 = vmatprep.subr.mxu0 0.0
    %471 = vmatpush1.xpose.msra.mxu0 0.0
    %472 = vmatprep.subr.mxu0 0.0
    %473 = vmatpush1.xpose.msra.mxu0 0.0
    %474 = vmatprep.subr.mxu0 0.0
    %475 = vmatpush1.xpose.msra.mxu0 0.0
    %476 = vmatprep.subr.mxu0 0.0
    %477 = vmatpush1.xpose.msra.mxu0 0.0
    %478 = vmatprep.subr.mxu0 0.0
    %479 = vmatpush1.xpose.msra.mxu0 0.0
    %480 = vmatprep.subr.mxu0 0.0
    %481 = vmatpush1.xpose.msra.mxu0 0.0
    %482 = vmatprep.subr.mxu0 0.0
    %483 = vmatpush1.xpose.msra.mxu0 0.0
    %484 = vmatprep.subr.mxu0 0.0
    %485 = vmatpush1.xpose.msra.mxu0 0.0
    %486 = vmatprep.subr.mxu0 0.0
    %487 = vmatpush1.xpose.msra.mxu0 0.0
    %488 = vmatprep.subr.mxu0 0.0
    %489 = vmatpush1.xpose.msra.mxu0 0.0
    %490 = vmatprep.subr.mxu0 0.0
    %491 = vmatpush1.xpose.msra.mxu0 0.0
    %492 = vmatprep.subr.mxu0 0.0
    %493 = vmatpush1.xpose.msra.mxu0 0.0
    %494 = vmatprep.subr.mxu0 0.0
    %495 = vmatpush1.xpose.msra.mxu0 0.0
    %496 = vmatprep.subr.mxu0 0.0
    %497 = vmatpush1.xpose.msra.mxu0 0.0
    %498 = vmatprep.subr.mxu0 0.0
    %499 = vmatpush1.xpose.msra.mxu0 0.0
    %500 = vmatprep.subr.mxu0 0.0
    %501 = vmatpush1.xpose.msra.mxu0 %v468
    %502 = vmatprep.subr.mxu0 0.0
    %503 = vmatpush2.xpose.msra.mxu0 0.0
    %504 = vmatprep.subr.mxu0 0.0
    %505 = vmatpush2.xpose.msra.mxu0 0.0
    %506 = vmatprep.subr.mxu0 0.0
    %507 = vmatpush2.xpose.msra.mxu0 0.0
    %508 = vmatprep.subr.mxu0 0.0
    %509 = vmatpush2.xpose.msra.mxu0 0.0
    %510 = vmatprep.subr.mxu0 0.0
    %511 = vmatpush2.xpose.msra.mxu0 0.0
    %512 = vmatprep.subr.mxu0 0.0
    %513 = vmatpush2.xpose.msra.mxu0 0.0
    %514 = vmatprep.subr.mxu0 0.0
    %515 = vmatpush2.xpose.msra.mxu0 0.0
    %516 = vmatprep.subr.mxu0 0.0
    %517 = vmatpush2.xpose.msra.mxu0 0.0
    %518 = vmatprep.subr.mxu0 0.0
    %519 = vmatpush2.xpose.msra.mxu0 0.0
    %520 = vmatprep.subr.mxu0 0.0
    %521 = vmatpush2.xpose.msra.mxu0 0.0
    %522 = vmatprep.subr.mxu0 0.0
    %523 = vmatpush2.xpose.msra.mxu0 0.0
    %524 = vmatprep.subr.mxu0 0.0
    %525 = vmatpush2.xpose.msra.mxu0 0.0
    %526 = vmatprep.subr.mxu0 0.0
    %527 = vmatpush2.xpose.msra.mxu0 0.0
    %528 = vmatprep.subr.mxu0 0.0
    %529 = vmatpush2.xpose.msra.mxu0 0.0
    %530 = vmatprep.subr.mxu0 0.0
    %531 = vmatpush2.xpose.msra.mxu0 0.0
    %532 = vmatprep.subr.mxu0 0.0
    %533 = vmatpush2.xpose.msra.mxu0 0.0
    %534 = vmatprep.mubr.f32.mxu0 0.0
    %535 = vmatmul.mubr.f32.gmra.mxu0 %v466
    %v536 = vpop.f32.mrf.mxu0
    %v537 = vadd.f32 0.0, %v536
    %v538 = vpop.f32.mrf.mxu0
    %539 = vdwg.mxu0
    %540 = vrot.lane.b32.xlu0 %v154, 96
    %v541 = vpop.permute.xlu0 %540
    %v542 = vsel %vm161, %v154, 0
    %v544 = vsel %vm161, %v541, 0
    %546 = vmatprep.subr.mxu0 0.0
    %547 = vmatpush1.xpose.msra.mxu0 0.0
    %548 = vmatprep.subr.mxu0 0.0
    %549 = vmatpush1.xpose.msra.mxu0 0.0
    %550 = vmatprep.subr.mxu0 0.0
    %551 = vmatpush1.xpose.msra.mxu0 0.0
    %552 = vmatprep.subr.mxu0 0.0
    %553 = vmatpush1.xpose.msra.mxu0 0.0
    %554 = vmatprep.subr.mxu0 0.0
    %555 = vmatpush1.xpose.msra.mxu0 0.0
    %556 = vmatprep.subr.mxu0 0.0
    %557 = vmatpush1.xpose.msra.mxu0 0.0
    %558 = vmatprep.subr.mxu0 0.0
    %559 = vmatpush1.xpose.msra.mxu0 0.0
    %560 = vmatprep.subr.mxu0 0.0
    %561 = vmatpush1.xpose.msra.mxu0 0.0
    %562 = vmatprep.subr.mxu0 0.0
    %563 = vmatpush1.xpose.msra.mxu0 0.0
    %564 = vmatprep.subr.mxu0 0.0
    %565 = vmatpush1.xpose.msra.mxu0 0.0
    %566 = vmatprep.subr.mxu0 0.0
    %567 = vmatpush1.xpose.msra.mxu0 0.0
    %568 = vmatprep.subr.mxu0 0.0
    %569 = vmatpush1.xpose.msra.mxu0 0.0
    %570 = vmatprep.subr.mxu0 0.0
    %571 = vmatpush1.xpose.msra.mxu0 0.0
    %572 = vmatprep.subr.mxu0 0.0
    %573 = vmatpush1.xpose.msra.mxu0 0.0
    %574 = vmatprep.subr.mxu0 0.0
    %575 = vmatpush1.xpose.msra.mxu0 0.0
    %576 = vmatprep.subr.mxu0 0.0
    %577 = vmatpush1.xpose.msra.mxu0 %v544
    %578 = vmatprep.subr.mxu0 0.0
    %579 = vmatpush2.xpose.msra.mxu0 0.0
    %580 = vmatprep.subr.mxu0 0.0
    %581 = vmatpush2.xpose.msra.mxu0 0.0
    %582 = vmatprep.subr.mxu0 0.0
    %583 = vmatpush2.xpose.msra.mxu0 0.0
    %584 = vmatprep.subr.mxu0 0.0
    %585 = vmatpush2.xpose.msra.mxu0 0.0
    %586 = vmatprep.subr.mxu0 0.0
    %587 = vmatpush2.xpose.msra.mxu0 0.0
    %588 = vmatprep.subr.mxu0 0.0
    %589 = vmatpush2.xpose.msra.mxu0 0.0
    %590 = vmatprep.subr.mxu0 0.0
    %591 = vmatpush2.xpose.msra.mxu0 0.0
    %592 = vmatprep.subr.mxu0 0.0
    %593 = vmatpush2.xpose.msra.mxu0 0.0
    %594 = vmatprep.subr.mxu0 0.0
    %595 = vmatpush2.xpose.msra.mxu0 0.0
    %596 = vmatprep.subr.mxu0 0.0
    %597 = vmatpush2.xpose.msra.mxu0 0.0
    %598 = vmatprep.subr.mxu0 0.0
    %599 = vmatpush2.xpose.msra.mxu0 0.0
    %600 = vmatprep.subr.mxu0 0.0
    %601 = vmatpush2.xpose.msra.mxu0 0.0
    %602 = vmatprep.subr.mxu0 0.0
    %603 = vmatpush2.xpose.msra.mxu0 0.0
    %604 = vmatprep.subr.mxu0 0.0
    %605 = vmatpush2.xpose.msra.mxu0 0.0
    %606 = vmatprep.subr.mxu0 0.0
    %607 = vmatpush2.xpose.msra.mxu0 0.0
    %608 = vmatprep.subr.mxu0 0.0
    %609 = vmatpush2.xpose.msra.mxu0 0.0
    %610 = vmatprep.mubr.f32.mxu0 0.0
    %611 = vmatmul.mubr.f32.gmra.mxu0 %v542
    %v612 = vpop.f32.mrf.mxu0
    %v613 = vadd.f32 0.0, %v612
    %v614 = vpop.f32.mrf.mxu0
    %615 = vdwg.mxu0
    %616 = vrot.lane.b32.xlu0 %v156, 96
    %v617 = vpop.permute.xlu0 %616
    %v618 = vsel %vm161, %v156, 0
    %v620 = vsel %vm161, %v617, 0
    %622 = vmatprep.subr.mxu0 0.0
    %623 = vmatpush1.xpose.msra.mxu0 0.0
    %624 = vmatprep.subr.mxu0 0.0
    %625 = vmatpush1.xpose.msra.mxu0 0.0
    %626 = vmatprep.subr.mxu0 0.0
    %627 = vmatpush1.xpose.msra.mxu0 0.0
    %628 = vmatprep.subr.mxu0 0.0
    %629 = vmatpush1.xpose.msra.mxu0 0.0
    %630 = vmatprep.subr.mxu0 0.0
    %631 = vmatpush1.xpose.msra.mxu0 0.0
    %632 = vmatprep.subr.mxu0 0.0
    %633 = vmatpush1.xpose.msra.mxu0 0.0
    %634 = vmatprep.subr.mxu0 0.0
    %635 = vmatpush1.xpose.msra.mxu0 0.0
    %636 = vmatprep.subr.mxu0 0.0
    %637 = vmatpush1.xpose.msra.mxu0 0.0
    %638 = vmatprep.subr.mxu0 0.0
    %639 = vmatpush1.xpose.msra.mxu0 0.0
    %640 = vmatprep.subr.mxu0 0.0
    %641 = vmatpush1.xpose.msra.mxu0 0.0
    %642 = vmatprep.subr.mxu0 0.0
    %643 = vmatpush1.xpose.msra.mxu0 0.0
    %644 = vmatprep.subr.mxu0 0.0
    %645 = vmatpush1.xpose.msra.mxu0 0.0
    %646 = vmatprep.subr.mxu0 0.0
    %647 = vmatpush1.xpose.msra.mxu0 0.0
    %648 = vmatprep.subr.mxu0 0.0
    %649 = vmatpush1.xpose.msra.mxu0 0.0
    %650 = vmatprep.subr.mxu0 0.0
    %651 = vmatpush1.xpose.msra.mxu0 0.0
    %652 = vmatprep.subr.mxu0 0.0
    %653 = vmatpush1.xpose.msra.mxu0 %v620
    %654 = vmatprep.subr.mxu0 0.0
    %655 = vmatpush2.xpose.msra.mxu0 0.0
    %656 = vmatprep.subr.mxu0 0.0
    %657 = vmatpush2.xpose.msra.mxu0 0.0
    %658 = vmatprep.subr.mxu0 0.0
    %659 = vmatpush2.xpose.msra.mxu0 0.0
    %660 = vmatprep.subr.mxu0 0.0
    %661 = vmatpush2.xpose.msra.mxu0 0.0
    %662 = vmatprep.subr.mxu0 0.0
    %663 = vmatpush2.xpose.msra.mxu0 0.0
    %664 = vmatprep.subr.mxu0 0.0
    %665 = vmatpush2.xpose.msra.mxu0 0.0
    %666 = vmatprep.subr.mxu0 0.0
    %667 = vmatpush2.xpose.msra.mxu0 0.0
    %668 = vmatprep.subr.mxu0 0.0
    %669 = vmatpush2.xpose.msra.mxu0 0.0
    %670 = vmatprep.subr.mxu0 0.0
    %671 = vmatpush2.xpose.msra.mxu0 0.0
    %672 = vmatprep.subr.mxu0 0.0
    %673 = vmatpush2.xpose.msra.mxu0 0.0
    %674 = vmatprep.subr.mxu0 0.0
    %675 = vmatpush2.xpose.msra.mxu0 0.0
    %676 = vmatprep.subr.mxu0 0.0
    %677 = vmatpush2.xpose.msra.mxu0 0.0
    %678 = vmatprep.subr.mxu0 0.0
    %679 = vmatpush2.xpose.msra.mxu0 0.0
    %680 = vmatprep.subr.mxu0 0.0
    %681 = vmatpush2.xpose.msra.mxu0 0.0
    %682 = vmatprep.subr.mxu0 0.0
    %683 = vmatpush2.xpose.msra.mxu0 0.0
    %684 = vmatprep.subr.mxu0 0.0
    %685 = vmatpush2.xpose.msra.mxu0 0.0
    %686 = vmatprep.mubr.f32.mxu0 0.0
    %687 = vmatmul.mubr.f32.gmra.mxu0 %v618
    %v688 = vpop.f32.mrf.mxu0
    %v689 = vadd.f32 0.0, %v688
    %v690 = vpop.f32.mrf.mxu0
    %691 = vdwg.mxu0
    %692 = vrot.lane.b32.xlu0 %v158, 96
    %v693 = vpop.permute.xlu0 %692
    %v694 = vsel %vm161, %v158, 0
    %v696 = vsel %vm161, %v693, 0
    %698 = vmatprep.subr.mxu0 0.0
    %699 = vmatpush1.xpose.msra.mxu0 0.0
    %700 = vmatprep.subr.mxu0 0.0
    %701 = vmatpush1.xpose.msra.mxu0 0.0
    %702 = vmatprep.subr.mxu0 0.0
    %703 = vmatpush1.xpose.msra.mxu0 0.0
    %704 = vmatprep.subr.mxu0 0.0
    %705 = vmatpush1.xpose.msra.mxu0 0.0
    %706 = vmatprep.subr.mxu0 0.0
    %707 = vmatpush1.xpose.msra.mxu0 0.0
    %708 = vmatprep.subr.mxu0 0.0
    %709 = vmatpush1.xpose.msra.mxu0 0.0
    %710 = vmatprep.subr.mxu0 0.0
    %711 = vmatpush1.xpose.msra.mxu0 0.0
    %712 = vmatprep.subr.mxu0 0.0
    %713 = vmatpush1.xpose.msra.mxu0 0.0
    %714 = vmatprep.subr.mxu0 0.0
    %715 = vmatpush1.xpose.msra.mxu0 0.0
    %716 = vmatprep.subr.mxu0 0.0
    %717 = vmatpush1.xpose.msra.mxu0 0.0
    %718 = vmatprep.subr.mxu0 0.0
    %719 = vmatpush1.xpose.msra.mxu0 0.0
    %720 = vmatprep.subr.mxu0 0.0
    %721 = vmatpush1.xpose.msra.mxu0 0.0
    %722 = vmatprep.subr.mxu0 0.0
    %723 = vmatpush1.xpose.msra.mxu0 0.0
    %724 = vmatprep.subr.mxu0 0.0
    %725 = vmatpush1.xpose.msra.mxu0 0.0
    %726 = vmatprep.subr.mxu0 0.0
    %727 = vmatpush1.xpose.msra.mxu0 0.0
    %728 = vmatprep.subr.mxu0 0.0
    %729 = vmatpush1.xpose.msra.mxu0 %v696
    %730 = vmatprep.subr.mxu0 0.0
    %731 = vmatpush2.xpose.msra.mxu0 0.0
    %732 = vmatprep.subr.mxu0 0.0
    %733 = vmatpush2.xpose.msra.mxu0 0.0
    %734 = vmatprep.subr.mxu0 0.0
    %735 = vmatpush2.xpose.msra.mxu0 0.0
    %736 = vmatprep.subr.mxu0 0.0
    %737 = vmatpush2.xpose.msra.mxu0 0.0
    %738 = vmatprep.subr.mxu0 0.0
    %739 = vmatpush2.xpose.msra.mxu0 0.0
    %740 = vmatprep.subr.mxu0 0.0
    %741 = vmatpush2.xpose.msra.mxu0 0.0
    %742 = vmatprep.subr.mxu0 0.0
    %743 = vmatpush2.xpose.msra.mxu0 0.0
    %744 = vmatprep.subr.mxu0 0.0
    %745 = vmatpush2.xpose.msra.mxu0 0.0
    %746 = vmatprep.subr.mxu0 0.0
    %747 = vmatpush2.xpose.msra.mxu0 0.0
    %748 = vmatprep.subr.mxu0 0.0
    %749 = vmatpush2.xpose.msra.mxu0 0.0
    %750 = vmatprep.subr.mxu0 0.0
    %751 = vmatpush2.xpose.msra.mxu0 0.0
    %752 = vmatprep.subr.mxu0 0.0
    %753 = vmatpush2.xpose.msra.mxu0 0.0
    %754 = vmatprep.subr.mxu0 0.0
    %755 = vmatpush2.xpose.msra.mxu0 0.0
    %756 = vmatprep.subr.mxu0 0.0
    %757 = vmatpush2.xpose.msra.mxu0 0.0
    %758 = vmatprep.subr.mxu0 0.0
    %759 = vmatpush2.xpose.msra.mxu0 0.0
    %760 = vmatprep.subr.mxu0 0.0
    %761 = vmatpush2.xpose.msra.mxu0 0.0
    %762 = vmatprep.mubr.f32.mxu0 0.0
    %763 = vmatmul.mubr.f32.gmra.mxu0 %v694
    %v764 = vpop.f32.mrf.mxu0
    %v765 = vadd.f32 0.0, %v764
    %v766 = vpop.f32.mrf.mxu0
    %767 = vdwg.mxu0
    %v768 = vmul.f32 %v233, 0.35355338
    %v769 = vmul.f32 %v309, 0.35355338
    %v770 = vmul.f32 %v385, 0.35355338
    %v771 = vmul.f32 %v461, 0.35355338
    %v772 = vmul.f32 %v537, 0.35355338
    %v773 = vmul.f32 %v613, 0.35355338
    %v774 = vmul.f32 %v689, 0.35355338
    %v775 = vmul.f32 %v765, 0.35355338
    %v776 = vsel %vm161, %v768, -inf
    %777 = vmax.xlane.f32.xlu0 %v776
    %v778 = vpop.xlane.xlu0 %777
    %v779 = vsel %vm161, %v769, -inf
    %780 = vmax.xlane.f32.xlu0 %v779
    %v781 = vpop.xlane.xlu0 %780
    %v782 = vsel %vm161, %v770, -inf
    %783 = vmax.xlane.f32.xlu0 %v782
    %v784 = vpop.xlane.xlu0 %783
    %v785 = vsel %vm161, %v771, -inf
    %786 = vmax.xlane.f32.xlu0 %v785
    %v787 = vpop.xlane.xlu0 %786
    %v788 = vsel %vm161, %v772, -inf
    %789 = vmax.xlane.f32.xlu0 %v788
    %v790 = vpop.xlane.xlu0 %789
    %v791 = vsel %vm161, %v773, -inf
    %792 = vmax.xlane.f32.xlu0 %v791
    %v793 = vpop.xlane.xlu0 %792
    %v794 = vsel %vm161, %v774, -inf
    %795 = vmax.xlane.f32.xlu0 %v794
    %v796 = vpop.xlane.xlu0 %795
    %v797 = vsel %vm161, %v775, -inf
    %798 = vmax.xlane.f32.xlu0 %v797
    %v799 = vpop.xlane.xlu0 %798
    %v800 = vsub.f32 %v768, %v778
    %v801 = vsub.f32 %v769, %v781
    %v802 = vsub.f32 %v770, %v784
    %v803 = vsub.f32 %v771, %v787
    %v804 = vsub.f32 %v772, %v790
    %v805 = vsub.f32 %v773, %v793
    %v806 = vsub.f32 %v774, %v796
    %v807 = vsub.f32 %v775, %v799
    %v808 = vmul.f32 %v800, 1.442695
    %v809 = vpow.pop %v808
    %v810 = vmul.f32 %v801, 1.442695
    %v811 = vpow.pop %v810
    %v812 = vmul.f32 %v802, 1.442695
    %v813 = vpow.pop %v812
    %v814 = vmul.f32 %v803, 1.442695
    %v815 = vpow.pop %v814
    %v816 = vmul.f32 %v804, 1.442695
    %v817 = vpow.pop %v816
    %v818 = vmul.f32 %v805, 1.442695
    %v819 = vpow.pop %v818
    %v820 = vmul.f32 %v806, 1.442695
    %v821 = vpow.pop %v820
    %v822 = vmul.f32 %v807, 1.442695
    %v823 = vpow.pop %v822
    %v824 = vsel %vm161, %v809, 0.0
    %825 = vadd.xlane.f32.xlu0 %v824
    %v826 = vpop.xlane.xlu0 %825
    %v827 = vsel %vm161, %v811, 0.0
    %828 = vadd.xlane.f32.xlu0 %v827
    %v829 = vpop.xlane.xlu0 %828
    %v830 = vsel %vm161, %v813, 0.0
    %831 = vadd.xlane.f32.xlu0 %v830
    %v832 = vpop.xlane.xlu0 %831
    %v833 = vsel %vm161, %v815, 0.0
    %834 = vadd.xlane.f32.xlu0 %v833
    %v835 = vpop.xlane.xlu0 %834
    %v836 = vsel %vm161, %v817, 0.0
    %837 = vadd.xlane.f32.xlu0 %v836
    %v838 = vpop.xlane.xlu0 %837
    %v839 = vsel %vm161, %v819, 0.0
    %840 = vadd.xlane.f32.xlu0 %v839
    %v841 = vpop.xlane.xlu0 %840
    %v842 = vsel %vm161, %v821, 0.0
    %843 = vadd.xlane.f32.xlu0 %v842
    %v844 = vpop.xlane.xlu0 %843
    %v845 = vsel %vm161, %v823, 0.0
    %846 = vadd.xlane.f32.xlu0 %v845
    %v847 = vpop.xlane.xlu0 %846
    %v848 = vrcp.pop %v826
    %v849 = vrcp.pop %v829
    %v850 = vrcp.pop %v832
    %v851 = vrcp.pop %v835
    %v852 = vrcp.pop %v838
    %v853 = vrcp.pop %v841
    %v854 = vrcp.pop %v844
    %v855 = vrcp.pop %v847
    %v856 = vmul.f32 %v809, %v848
    %v857 = vmul.f32 %v811, %v849
    %v858 = vmul.f32 %v813, %v850
    %v859 = vmul.f32 %v815, %v851
    %v860 = vmul.f32 %v817, %v852
    %v861 = vmul.f32 %v819, %v853
    %v862 = vmul.f32 %v821, %v854
    %v863 = vmul.f32 %v823, %v855
    %864 = vrot.lane.b32.xlu0 %v137, 64
    %v865 = vpop.permute.xlu0 %864
    %v868 = vsel %vm161, %v856, 0
    %870 = vmatprep.subr.mxu0 0.0
    %871 = vmatpush1.msra.mxu0 0.0
    %872 = vmatprep.subr.mxu0 0.0
    %873 = vmatpush1.msra.mxu0 0.0
    %874 = vmatprep.subr.mxu0 0.0
    %875 = vmatpush1.msra.mxu0 0.0
    %876 = vmatprep.subr.mxu0 0.0
    %877 = vmatpush1.msra.mxu0 0.0
    %878 = vmatprep.subr.mxu0 0.0
    %879 = vmatpush1.msra.mxu0 0.0
    %880 = vmatprep.subr.mxu0 0.0
    %881 = vmatpush1.msra.mxu0 0.0
    %882 = vmatprep.subr.mxu0 0.0
    %883 = vmatpush1.msra.mxu0 0.0
    %884 = vmatprep.subr.mxu0 0.0
    %885 = vmatpush1.msra.mxu0 0.0
    %886 = vmatprep.subr.mxu0 0.0
    %887 = vmatpush1.msra.mxu0 0.0
    %888 = vmatprep.subr.mxu0 0.0
    %889 = vmatpush1.msra.mxu0 0.0
    %890 = vmatprep.subr.mxu0 0.0
    %891 = vmatpush1.msra.mxu0 0.0
    %892 = vmatprep.subr.mxu0 0.0
    %893 = vmatpush1.msra.mxu0 0.0
    %894 = vmatprep.subr.mxu0 0.0
    %895 = vmatpush1.msra.mxu0 0.0
    %896 = vmatprep.subr.mxu0 0.0
    %897 = vmatpush1.msra.mxu0 0.0
    %898 = vmatprep.subr.mxu0 0.0
    %899 = vmatpush1.msra.mxu0 0.0
    %900 = vmatprep.subr.mxu0 0.0
    %901 = vmatpush1.msra.mxu0 %v865
    %902 = vmatprep.subr.mxu0 0.0
    %903 = vmatpush2.msra.mxu0 0.0
    %904 = vmatprep.subr.mxu0 0.0
    %905 = vmatpush2.msra.mxu0 0.0
    %906 = vmatprep.subr.mxu0 0.0
    %907 = vmatpush2.msra.mxu0 0.0
    %908 = vmatprep.subr.mxu0 0.0
    %909 = vmatpush2.msra.mxu0 0.0
    %910 = vmatprep.subr.mxu0 0.0
    %911 = vmatpush2.msra.mxu0 0.0
    %912 = vmatprep.subr.mxu0 0.0
    %913 = vmatpush2.msra.mxu0 0.0
    %914 = vmatprep.subr.mxu0 0.0
    %915 = vmatpush2.msra.mxu0 0.0
    %916 = vmatprep.subr.mxu0 0.0
    %917 = vmatpush2.msra.mxu0 0.0
    %918 = vmatprep.subr.mxu0 0.0
    %919 = vmatpush2.msra.mxu0 0.0
    %920 = vmatprep.subr.mxu0 0.0
    %921 = vmatpush2.msra.mxu0 0.0
    %922 = vmatprep.subr.mxu0 0.0
    %923 = vmatpush2.msra.mxu0 0.0
    %924 = vmatprep.subr.mxu0 0.0
    %925 = vmatpush2.msra.mxu0 0.0
    %926 = vmatprep.subr.mxu0 0.0
    %927 = vmatpush2.msra.mxu0 0.0
    %928 = vmatprep.subr.mxu0 0.0
    %929 = vmatpush2.msra.mxu0 0.0
    %930 = vmatprep.subr.mxu0 0.0
    %931 = vmatpush2.msra.mxu0 0.0
    %932 = vmatprep.subr.mxu0 0.0
    %933 = vmatpush2.msra.mxu0 0.0
    %934 = vmatprep.mubr.f32.mxu0 0.0
    %935 = vmatmul.mubr.f32.gmra.mxu0 %v868
    %v936 = vpop.f32.mrf.mxu0
    %v937 = vadd.f32 0.0, %v936
    %v938 = vpop.f32.mrf.mxu0
    %939 = vdwg.mxu0
    %940 = vrot.lane.b32.xlu0 %v142, 64
    %v941 = vpop.permute.xlu0 %940
    %v944 = vsel %vm161, %v857, 0
    %946 = vmatprep.subr.mxu0 0.0
    %947 = vmatpush1.msra.mxu0 0.0
    %948 = vmatprep.subr.mxu0 0.0
    %949 = vmatpush1.msra.mxu0 0.0
    %950 = vmatprep.subr.mxu0 0.0
    %951 = vmatpush1.msra.mxu0 0.0
    %952 = vmatprep.subr.mxu0 0.0
    %953 = vmatpush1.msra.mxu0 0.0
    %954 = vmatprep.subr.mxu0 0.0
    %955 = vmatpush1.msra.mxu0 0.0
    %956 = vmatprep.subr.mxu0 0.0
    %957 = vmatpush1.msra.mxu0 0.0
    %958 = vmatprep.subr.mxu0 0.0
    %959 = vmatpush1.msra.mxu0 0.0
    %960 = vmatprep.subr.mxu0 0.0
    %961 = vmatpush1.msra.mxu0 0.0
    %962 = vmatprep.subr.mxu0 0.0
    %963 = vmatpush1.msra.mxu0 0.0
    %964 = vmatprep.subr.mxu0 0.0
    %965 = vmatpush1.msra.mxu0 0.0
    %966 = vmatprep.subr.mxu0 0.0
    %967 = vmatpush1.msra.mxu0 0.0
    %968 = vmatprep.subr.mxu0 0.0
    %969 = vmatpush1.msra.mxu0 0.0
    %970 = vmatprep.subr.mxu0 0.0
    %971 = vmatpush1.msra.mxu0 0.0
    %972 = vmatprep.subr.mxu0 0.0
    %973 = vmatpush1.msra.mxu0 0.0
    %974 = vmatprep.subr.mxu0 0.0
    %975 = vmatpush1.msra.mxu0 0.0
    %976 = vmatprep.subr.mxu0 0.0
    %977 = vmatpush1.msra.mxu0 %v941
    %978 = vmatprep.subr.mxu0 0.0
    %979 = vmatpush2.msra.mxu0 0.0
    %980 = vmatprep.subr.mxu0 0.0
    %981 = vmatpush2.msra.mxu0 0.0
    %982 = vmatprep.subr.mxu0 0.0
    %983 = vmatpush2.msra.mxu0 0.0
    %984 = vmatprep.subr.mxu0 0.0
    %985 = vmatpush2.msra.mxu0 0.0
    %986 = vmatprep.subr.mxu0 0.0
    %987 = vmatpush2.msra.mxu0 0.0
    %988 = vmatprep.subr.mxu0 0.0
    %989 = vmatpush2.msra.mxu0 0.0
    %990 = vmatprep.subr.mxu0 0.0
    %991 = vmatpush2.msra.mxu0 0.0
    %992 = vmatprep.subr.mxu0 0.0
    %993 = vmatpush2.msra.mxu0 0.0
    %994 = vmatprep.subr.mxu0 0.0
    %995 = vmatpush2.msra.mxu0 0.0
    %996 = vmatprep.subr.mxu0 0.0
    %997 = vmatpush2.msra.mxu0 0.0
    %998 = vmatprep.subr.mxu0 0.0
    %999 = vmatpush2.msra.mxu0 0.0
    %1000 = vmatprep.subr.mxu0 0.0
    %1001 = vmatpush2.msra.mxu0 0.0
    %1002 = vmatprep.subr.mxu0 0.0
    %1003 = vmatpush2.msra.mxu0 0.0
    %1004 = vmatprep.subr.mxu0 0.0
    %1005 = vmatpush2.msra.mxu0 0.0
    %1006 = vmatprep.subr.mxu0 0.0
    %1007 = vmatpush2.msra.mxu0 0.0
    %1008 = vmatprep.subr.mxu0 0.0
    %1009 = vmatpush2.msra.mxu0 0.0
    %1010 = vmatprep.mubr.f32.mxu0 0.0
    %1011 = vmatmul.mubr.f32.gmra.mxu0 %v944
    %v1012 = vpop.f32.mrf.mxu0
    %v1013 = vadd.f32 0.0, %v1012
    %v1014 = vpop.f32.mrf.mxu0
    %1015 = vdwg.mxu0
    %1016 = vrot.lane.b32.xlu0 %v148, 64
    %v1017 = vpop.permute.xlu0 %1016
    %v1020 = vsel %vm161, %v858, 0
    %1022 = vmatprep.subr.mxu0 0.0
    %1023 = vmatpush1.msra.mxu0 0.0
    %1024 = vmatprep.subr.mxu0 0.0
    %1025 = vmatpush1.msra.mxu0 0.0
    %1026 = vmatprep.subr.mxu0 0.0
    %1027 = vmatpush1.msra.mxu0 0.0
    %1028 = vmatprep.subr.mxu0 0.0
    %1029 = vmatpush1.msra.mxu0 0.0
    %1030 = vmatprep.subr.mxu0 0.0
    %1031 = vmatpush1.msra.mxu0 0.0
    %1032 = vmatprep.subr.mxu0 0.0
    %1033 = vmatpush1.msra.mxu0 0.0
    %1034 = vmatprep.subr.mxu0 0.0
    %1035 = vmatpush1.msra.mxu0 0.0
    %1036 = vmatprep.subr.mxu0 0.0
    %1037 = vmatpush1.msra.mxu0 0.0
    %1038 = vmatprep.subr.mxu0 0.0
    %1039 = vmatpush1.msra.mxu0 0.0
    %1040 = vmatprep.subr.mxu0 0.0
    %1041 = vmatpush1.msra.mxu0 0.0
    %1042 = vmatprep.subr.mxu0 0.0
    %1043 = vmatpush1.msra.mxu0 0.0
    %1044 = vmatprep.subr.mxu0 0.0
    %1045 = vmatpush1.msra.mxu0 0.0
    %1046 = vmatprep.subr.mxu0 0.0
    %1047 = vmatpush1.msra.mxu0 0.0
    %1048 = vmatprep.subr.mxu0 0.0
    %1049 = vmatpush1.msra.mxu0 0.0
    %1050 = vmatprep.subr.mxu0 0.0
    %1051 = vmatpush1.msra.mxu0 0.0
    %1052 = vmatprep.subr.mxu0 0.0
    %1053 = vmatpush1.msra.mxu0 %v1017
    %1054 = vmatprep.subr.mxu0 0.0
    %1055 = vmatpush2.msra.mxu0 0.0
    %1056 = vmatprep.subr.mxu0 0.0
    %1057 = vmatpush2.msra.mxu0 0.0
    %1058 = vmatprep.subr.mxu0 0.0
    %1059 = vmatpush2.msra.mxu0 0.0
    %1060 = vmatprep.subr.mxu0 0.0
    %1061 = vmatpush2.msra.mxu0 0.0
    %1062 = vmatprep.subr.mxu0 0.0
    %1063 = vmatpush2.msra.mxu0 0.0
    %1064 = vmatprep.subr.mxu0 0.0
    %1065 = vmatpush2.msra.mxu0 0.0
    %1066 = vmatprep.subr.mxu0 0.0
    %1067 = vmatpush2.msra.mxu0 0.0
    %1068 = vmatprep.subr.mxu0 0.0
    %1069 = vmatpush2.msra.mxu0 0.0
    %1070 = vmatprep.subr.mxu0 0.0
    %1071 = vmatpush2.msra.mxu0 0.0
    %1072 = vmatprep.subr.mxu0 0.0
    %1073 = vmatpush2.msra.mxu0 0.0
    %1074 = vmatprep.subr.mxu0 0.0
    %1075 = vmatpush2.msra.mxu0 0.0
    %1076 = vmatprep.subr.mxu0 0.0
    %1077 = vmatpush2.msra.mxu0 0.0
    %1078 = vmatprep.subr.mxu0 0.0
    %1079 = vmatpush2.msra.mxu0 0.0
    %1080 = vmatprep.subr.mxu0 0.0
    %1081 = vmatpush2.msra.mxu0 0.0
    %1082 = vmatprep.subr.mxu0 0.0
    %1083 = vmatpush2.msra.mxu0 0.0
    %1084 = vmatprep.subr.mxu0 0.0
    %1085 = vmatpush2.msra.mxu0 0.0
    %1086 = vmatprep.mubr.f32.mxu0 0.0
    %1087 = vmatmul.mubr.f32.gmra.mxu0 %v1020
    %v1088 = vpop.f32.mrf.mxu0
    %v1089 = vadd.f32 0.0, %v1088
    %v1090 = vpop.f32.mrf.mxu0
    %1091 = vdwg.mxu0
    %1092 = vrot.lane.b32.xlu0 %v150, 64
    %v1093 = vpop.permute.xlu0 %1092
    %v1096 = vsel %vm161, %v859, 0
    %1098 = vmatprep.subr.mxu0 0.0
    %1099 = vmatpush1.msra.mxu0 0.0
    %1100 = vmatprep.subr.mxu0 0.0
    %1101 = vmatpush1.msra.mxu0 0.0
    %1102 = vmatprep.subr.mxu0 0.0
    %1103 = vmatpush1.msra.mxu0 0.0
    %1104 = vmatprep.subr.mxu0 0.0
    %1105 = vmatpush1.msra.mxu0 0.0
    %1106 = vmatprep.subr.mxu0 0.0
    %1107 = vmatpush1.msra.mxu0 0.0
    %1108 = vmatprep.subr.mxu0 0.0
    %1109 = vmatpush1.msra.mxu0 0.0
    %1110 = vmatprep.subr.mxu0 0.0
    %1111 = vmatpush1.msra.mxu0 0.0
    %1112 = vmatprep.subr.mxu0 0.0
    %1113 = vmatpush1.msra.mxu0 0.0
    %1114 = vmatprep.subr.mxu0 0.0
    %1115 = vmatpush1.msra.mxu0 0.0
    %1116 = vmatprep.subr.mxu0 0.0
    %1117 = vmatpush1.msra.mxu0 0.0
    %1118 = vmatprep.subr.mxu0 0.0
    %1119 = vmatpush1.msra.mxu0 0.0
    %1120 = vmatprep.subr.mxu0 0.0
    %1121 = vmatpush1.msra.mxu0 0.0
    %1122 = vmatprep.subr.mxu0 0.0
    %1123 = vmatpush1.msra.mxu0 0.0
    %1124 = vmatprep.subr.mxu0 0.0
    %1125 = vmatpush1.msra.mxu0 0.0
    %1126 = vmatprep.subr.mxu0 0.0
    %1127 = vmatpush1.msra.mxu0 0.0
    %1128 = vmatprep.subr.mxu0 0.0
    %1129 = vmatpush1.msra.mxu0 %v1093
    %1130 = vmatprep.subr.mxu0 0.0
    %1131 = vmatpush2.msra.mxu0 0.0
    %1132 = vmatprep.subr.mxu0 0.0
    %1133 = vmatpush2.msra.mxu0 0.0
    %1134 = vmatprep.subr.mxu0 0.0
    %1135 = vmatpush2.msra.mxu0 0.0
    %1136 = vmatprep.subr.mxu0 0.0
    %1137 = vmatpush2.msra.mxu0 0.0
    %1138 = vmatprep.subr.mxu0 0.0
    %1139 = vmatpush2.msra.mxu0 0.0
    %1140 = vmatprep.subr.mxu0 0.0
    %1141 = vmatpush2.msra.mxu0 0.0
    %1142 = vmatprep.subr.mxu0 0.0
    %1143 = vmatpush2.msra.mxu0 0.0
    %1144 = vmatprep.subr.mxu0 0.0
    %1145 = vmatpush2.msra.mxu0 0.0
    %1146 = vmatprep.subr.mxu0 0.0
    %1147 = vmatpush2.msra.mxu0 0.0
    %1148 = vmatprep.subr.mxu0 0.0
    %1149 = vmatpush2.msra.mxu0 0.0
    %1150 = vmatprep.subr.mxu0 0.0
    %1151 = vmatpush2.msra.mxu0 0.0
    %1152 = vmatprep.subr.mxu0 0.0
    %1153 = vmatpush2.msra.mxu0 0.0
    %1154 = vmatprep.subr.mxu0 0.0
    %1155 = vmatpush2.msra.mxu0 0.0
    %1156 = vmatprep.subr.mxu0 0.0
    %1157 = vmatpush2.msra.mxu0 0.0
    %1158 = vmatprep.subr.mxu0 0.0
    %1159 = vmatpush2.msra.mxu0 0.0
    %1160 = vmatprep.subr.mxu0 0.0
    %1161 = vmatpush2.msra.mxu0 0.0
    %1162 = vmatprep.mubr.f32.mxu0 0.0
    %1163 = vmatmul.mubr.f32.gmra.mxu0 %v1096
    %v1164 = vpop.f32.mrf.mxu0
    %v1165 = vadd.f32 0.0, %v1164
    %v1166 = vpop.f32.mrf.mxu0
    %1167 = vdwg.mxu0
    %1168 = vrot.lane.b32.xlu0 %v152, 64
    %v1169 = vpop.permute.xlu0 %1168
    %v1172 = vsel %vm161, %v860, 0
    %1174 = vmatprep.subr.mxu0 0.0
    %1175 = vmatpush1.msra.mxu0 0.0
    %1176 = vmatprep.subr.mxu0 0.0
    %1177 = vmatpush1.msra.mxu0 0.0
    %1178 = vmatprep.subr.mxu0 0.0
    %1179 = vmatpush1.msra.mxu0 0.0
    %1180 = vmatprep.subr.mxu0 0.0
    %1181 = vmatpush1.msra.mxu0 0.0
    %1182 = vmatprep.subr.mxu0 0.0
    %1183 = vmatpush1.msra.mxu0 0.0
    %1184 = vmatprep.subr.mxu0 0.0
    %1185 = vmatpush1.msra.mxu0 0.0
    %1186 = vmatprep.subr.mxu0 0.0
    %1187 = vmatpush1.msra.mxu0 0.0
    %1188 = vmatprep.subr.mxu0 0.0
    %1189 = vmatpush1.msra.mxu0 0.0
    %1190 = vmatprep.subr.mxu0 0.0
    %1191 = vmatpush1.msra.mxu0 0.0
    %1192 = vmatprep.subr.mxu0 0.0
    %1193 = vmatpush1.msra.mxu0 0.0
    %1194 = vmatprep.subr.mxu0 0.0
    %1195 = vmatpush1.msra.mxu0 0.0
    %1196 = vmatprep.subr.mxu0 0.0
    %1197 = vmatpush1.msra.mxu0 0.0
    %1198 = vmatprep.subr.mxu0 0.0
    %1199 = vmatpush1.msra.mxu0 0.0
    %1200 = vmatprep.subr.mxu0 0.0
    %1201 = vmatpush1.msra.mxu0 0.0
    %1202 = vmatprep.subr.mxu0 0.0
    %1203 = vmatpush1.msra.mxu0 0.0
    %1204 = vmatprep.subr.mxu0 0.0
    %1205 = vmatpush1.msra.mxu0 %v1169
    %1206 = vmatprep.subr.mxu0 0.0
    %1207 = vmatpush2.msra.mxu0 0.0
    %1208 = vmatprep.subr.mxu0 0.0
    %1209 = vmatpush2.msra.mxu0 0.0
    %1210 = vmatprep.subr.mxu0 0.0
    %1211 = vmatpush2.msra.mxu0 0.0
    %1212 = vmatprep.subr.mxu0 0.0
    %1213 = vmatpush2.msra.mxu0 0.0
    %1214 = vmatprep.subr.mxu0 0.0
    %1215 = vmatpush2.msra.mxu0 0.0
    %1216 = vmatprep.subr.mxu0 0.0
    %1217 = vmatpush2.msra.mxu0 0.0
    %1218 = vmatprep.subr.mxu0 0.0
    %1219 = vmatpush2.msra.mxu0 0.0
    %1220 = vmatprep.subr.mxu0 0.0
    %1221 = vmatpush2.msra.mxu0 0.0
    %1222 = vmatprep.subr.mxu0 0.0
    %1223 = vmatpush2.msra.mxu0 0.0
    %1224 = vmatprep.subr.mxu0 0.0
    %1225 = vmatpush2.msra.mxu0 0.0
    %1226 = vmatprep.subr.mxu0 0.0
    %1227 = vmatpush2.msra.mxu0 0.0
    %1228 = vmatprep.subr.mxu0 0.0
    %1229 = vmatpush2.msra.mxu0 0.0
    %1230 = vmatprep.subr.mxu0 0.0
    %1231 = vmatpush2.msra.mxu0 0.0
    %1232 = vmatprep.subr.mxu0 0.0
    %1233 = vmatpush2.msra.mxu0 0.0
    %1234 = vmatprep.subr.mxu0 0.0
    %1235 = vmatpush2.msra.mxu0 0.0
    %1236 = vmatprep.subr.mxu0 0.0
    %1237 = vmatpush2.msra.mxu0 0.0
    %1238 = vmatprep.mubr.f32.mxu0 0.0
    %1239 = vmatmul.mubr.f32.gmra.mxu0 %v1172
    %v1240 = vpop.f32.mrf.mxu0
    %v1241 = vadd.f32 0.0, %v1240
    %v1242 = vpop.f32.mrf.mxu0
    %1243 = vdwg.mxu0
    %1244 = vrot.lane.b32.xlu0 %v154, 64
    %v1245 = vpop.permute.xlu0 %1244
    %v1248 = vsel %vm161, %v861, 0
    %1250 = vmatprep.subr.mxu0 0.0
    %1251 = vmatpush1.msra.mxu0 0.0
    %1252 = vmatprep.subr.mxu0 0.0
    %1253 = vmatpush1.msra.mxu0 0.0
    %1254 = vmatprep.subr.mxu0 0.0
    %1255 = vmatpush1.msra.mxu0 0.0
    %1256 = vmatprep.subr.mxu0 0.0
    %1257 = vmatpush1.msra.mxu0 0.0
    %1258 = vmatprep.subr.mxu0 0.0
    %1259 = vmatpush1.msra.mxu0 0.0
    %1260 = vmatprep.subr.mxu0 0.0
    %1261 = vmatpush1.msra.mxu0 0.0
    %1262 = vmatprep.subr.mxu0 0.0
    %1263 = vmatpush1.msra.mxu0 0.0
    %1264 = vmatprep.subr.mxu0 0.0
    %1265 = vmatpush1.msra.mxu0 0.0
    %1266 = vmatprep.subr.mxu0 0.0
    %1267 = vmatpush1.msra.mxu0 0.0
    %1268 = vmatprep.subr.mxu0 0.0
    %1269 = vmatpush1.msra.mxu0 0.0
    %1270 = vmatprep.subr.mxu0 0.0
    %1271 = vmatpush1.msra.mxu0 0.0
    %1272 = vmatprep.subr.mxu0 0.0
    %1273 = vmatpush1.msra.mxu0 0.0
    %1274 = vmatprep.subr.mxu0 0.0
    %1275 = vmatpush1.msra.mxu0 0.0
    %1276 = vmatprep.subr.mxu0 0.0
    %1277 = vmatpush1.msra.mxu0 0.0
    %1278 = vmatprep.subr.mxu0 0.0
    %1279 = vmatpush1.msra.mxu0 0.0
    %1280 = vmatprep.subr.mxu0 0.0
    %1281 = vmatpush1.msra.mxu0 %v1245
    %1282 = vmatprep.subr.mxu0 0.0
    %1283 = vmatpush2.msra.mxu0 0.0
    %1284 = vmatprep.subr.mxu0 0.0
    %1285 = vmatpush2.msra.mxu0 0.0
    %1286 = vmatprep.subr.mxu0 0.0
    %1287 = vmatpush2.msra.mxu0 0.0
    %1288 = vmatprep.subr.mxu0 0.0
    %1289 = vmatpush2.msra.mxu0 0.0
    %1290 = vmatprep.subr.mxu0 0.0
    %1291 = vmatpush2.msra.mxu0 0.0
    %1292 = vmatprep.subr.mxu0 0.0
    %1293 = vmatpush2.msra.mxu0 0.0
    %1294 = vmatprep.subr.mxu0 0.0
    %1295 = vmatpush2.msra.mxu0 0.0
    %1296 = vmatprep.subr.mxu0 0.0
    %1297 = vmatpush2.msra.mxu0 0.0
    %1298 = vmatprep.subr.mxu0 0.0
    %1299 = vmatpush2.msra.mxu0 0.0
    %1300 = vmatprep.subr.mxu0 0.0
    %1301 = vmatpush2.msra.mxu0 0.0
    %1302 = vmatprep.subr.mxu0 0.0
    %1303 = vmatpush2.msra.mxu0 0.0
    %1304 = vmatprep.subr.mxu0 0.0
    %1305 = vmatpush2.msra.mxu0 0.0
    %1306 = vmatprep.subr.mxu0 0.0
    %1307 = vmatpush2.msra.mxu0 0.0
    %1308 = vmatprep.subr.mxu0 0.0
    %1309 = vmatpush2.msra.mxu0 0.0
    %1310 = vmatprep.subr.mxu0 0.0
    %1311 = vmatpush2.msra.mxu0 0.0
    %1312 = vmatprep.subr.mxu0 0.0
    %1313 = vmatpush2.msra.mxu0 0.0
    %1314 = vmatprep.mubr.f32.mxu0 0.0
    %1315 = vmatmul.mubr.f32.gmra.mxu0 %v1248
    %v1316 = vpop.f32.mrf.mxu0
    %v1317 = vadd.f32 0.0, %v1316
    %v1318 = vpop.f32.mrf.mxu0
    %1319 = vdwg.mxu0
    %1320 = vrot.lane.b32.xlu0 %v156, 64
    %v1321 = vpop.permute.xlu0 %1320
    %v1324 = vsel %vm161, %v862, 0
    %1326 = vmatprep.subr.mxu0 0.0
    %1327 = vmatpush1.msra.mxu0 0.0
    %1328 = vmatprep.subr.mxu0 0.0
    %1329 = vmatpush1.msra.mxu0 0.0
    %1330 = vmatprep.subr.mxu0 0.0
    %1331 = vmatpush1.msra.mxu0 0.0
    %1332 = vmatprep.subr.mxu0 0.0
    %1333 = vmatpush1.msra.mxu0 0.0
    %1334 = vmatprep.subr.mxu0 0.0
    %1335 = vmatpush1.msra.mxu0 0.0
    %1336 = vmatprep.subr.mxu0 0.0
    %1337 = vmatpush1.msra.mxu0 0.0
    %1338 = vmatprep.subr.mxu0 0.0
    %1339 = vmatpush1.msra.mxu0 0.0
    %1340 = vmatprep.subr.mxu0 0.0
    %1341 = vmatpush1.msra.mxu0 0.0
    %1342 = vmatprep.subr.mxu0 0.0
    %1343 = vmatpush1.msra.mxu0 0.0
    %1344 = vmatprep.subr.mxu0 0.0
    %1345 = vmatpush1.msra.mxu0 0.0
    %1346 = vmatprep.subr.mxu0 0.0
    %1347 = vmatpush1.msra.mxu0 0.0
    %1348 = vmatprep.subr.mxu0 0.0
    %1349 = vmatpush1.msra.mxu0 0.0
    %1350 = vmatprep.subr.mxu0 0.0
    %1351 = vmatpush1.msra.mxu0 0.0
    %1352 = vmatprep.subr.mxu0 0.0
    %1353 = vmatpush1.msra.mxu0 0.0
    %1354 = vmatprep.subr.mxu0 0.0
    %1355 = vmatpush1.msra.mxu0 0.0
    %1356 = vmatprep.subr.mxu0 0.0
    %1357 = vmatpush1.msra.mxu0 %v1321
    %1358 = vmatprep.subr.mxu0 0.0
    %1359 = vmatpush2.msra.mxu0 0.0
    %1360 = vmatprep.subr.mxu0 0.0
    %1361 = vmatpush2.msra.mxu0 0.0
    %1362 = vmatprep.subr.mxu0 0.0
    %1363 = vmatpush2.msra.mxu0 0.0
    %1364 = vmatprep.subr.mxu0 0.0
    %1365 = vmatpush2.msra.mxu0 0.0
    %1366 = vmatprep.subr.mxu0 0.0
    %1367 = vmatpush2.msra.mxu0 0.0
    %1368 = vmatprep.subr.mxu0 0.0
    %1369 = vmatpush2.msra.mxu0 0.0
    %1370 = vmatprep.subr.mxu0 0.0
    %1371 = vmatpush2.msra.mxu0 0.0
    %1372 = vmatprep.subr.mxu0 0.0
    %1373 = vmatpush2.msra.mxu0 0.0
    %1374 = vmatprep.subr.mxu0 0.0
    %1375 = vmatpush2.msra.mxu0 0.0
    %1376 = vmatprep.subr.mxu0 0.0
    %1377 = vmatpush2.msra.mxu0 0.0
    %1378 = vmatprep.subr.mxu0 0.0
    %1379 = vmatpush2.msra.mxu0 0.0
    %1380 = vmatprep.subr.mxu0 0.0
    %1381 = vmatpush2.msra.mxu0 0.0
    %1382 = vmatprep.subr.mxu0 0.0
    %1383 = vmatpush2.msra.mxu0 0.0
    %1384 = vmatprep.subr.mxu0 0.0
    %1385 = vmatpush2.msra.mxu0 0.0
    %1386 = vmatprep.subr.mxu0 0.0
    %1387 = vmatpush2.msra.mxu0 0.0
    %1388 = vmatprep.subr.mxu0 0.0
    %1389 = vmatpush2.msra.mxu0 0.0
    %1390 = vmatprep.mubr.f32.mxu0 0.0
    %1391 = vmatmul.mubr.f32.gmra.mxu0 %v1324
    %v1392 = vpop.f32.mrf.mxu0
    %v1393 = vadd.f32 0.0, %v1392
    %v1394 = vpop.f32.mrf.mxu0
    %1395 = vdwg.mxu0
    %1396 = vrot.lane.b32.xlu0 %v158, 64
    %v1397 = vpop.permute.xlu0 %1396
    %v1400 = vsel %vm161, %v863, 0
    %1402 = vmatprep.subr.mxu0 0.0
    %1403 = vmatpush1.msra.mxu0 0.0
    %1404 = vmatprep.subr.mxu0 0.0
    %1405 = vmatpush1.msra.mxu0 0.0
    %1406 = vmatprep.subr.mxu0 0.0
    %1407 = vmatpush1.msra.mxu0 0.0
    %1408 = vmatprep.subr.mxu0 0.0
    %1409 = vmatpush1.msra.mxu0 0.0
    %1410 = vmatprep.subr.mxu0 0.0
    %1411 = vmatpush1.msra.mxu0 0.0
    %1412 = vmatprep.subr.mxu0 0.0
    %1413 = vmatpush1.msra.mxu0 0.0
    %1414 = vmatprep.subr.mxu0 0.0
    %1415 = vmatpush1.msra.mxu0 0.0
    %1416 = vmatprep.subr.mxu0 0.0
    %1417 = vmatpush1.msra.mxu0 0.0
    %1418 = vmatprep.subr.mxu0 0.0
    %1419 = vmatpush1.msra.mxu0 0.0
    %1420 = vmatprep.subr.mxu0 0.0
    %1421 = vmatpush1.msra.mxu0 0.0
    %1422 = vmatprep.subr.mxu0 0.0
    %1423 = vmatpush1.msra.mxu0 0.0
    %1424 = vmatprep.subr.mxu0 0.0
    %1425 = vmatpush1.msra.mxu0 0.0
    %1426 = vmatprep.subr.mxu0 0.0
    %1427 = vmatpush1.msra.mxu0 0.0
    %1428 = vmatprep.subr.mxu0 0.0
    %1429 = vmatpush1.msra.mxu0 0.0
    %1430 = vmatprep.subr.mxu0 0.0
    %1431 = vmatpush1.msra.mxu0 0.0
    %1432 = vmatprep.subr.mxu0 0.0
    %1433 = vmatpush1.msra.mxu0 %v1397
    %1434 = vmatprep.subr.mxu0 0.0
    %1435 = vmatpush2.msra.mxu0 0.0
    %1436 = vmatprep.subr.mxu0 0.0
    %1437 = vmatpush2.msra.mxu0 0.0
    %1438 = vmatprep.subr.mxu0 0.0
    %1439 = vmatpush2.msra.mxu0 0.0
    %1440 = vmatprep.subr.mxu0 0.0
    %1441 = vmatpush2.msra.mxu0 0.0
    %1442 = vmatprep.subr.mxu0 0.0
    %1443 = vmatpush2.msra.mxu0 0.0
    %1444 = vmatprep.subr.mxu0 0.0
    %1445 = vmatpush2.msra.mxu0 0.0
    %1446 = vmatprep.subr.mxu0 0.0
    %1447 = vmatpush2.msra.mxu0 0.0
    %1448 = vmatprep.subr.mxu0 0.0
    %1449 = vmatpush2.msra.mxu0 0.0
    %1450 = vmatprep.subr.mxu0 0.0
    %1451 = vmatpush2.msra.mxu0 0.0
    %1452 = vmatprep.subr.mxu0 0.0
    %1453 = vmatpush2.msra.mxu0 0.0
    %1454 = vmatprep.subr.mxu0 0.0
    %1455 = vmatpush2.msra.mxu0 0.0
    %1456 = vmatprep.subr.mxu0 0.0
    %1457 = vmatpush2.msra.mxu0 0.0
    %1458 = vmatprep.subr.mxu0 0.0
    %1459 = vmatpush2.msra.mxu0 0.0
    %1460 = vmatprep.subr.mxu0 0.0
    %1461 = vmatpush2.msra.mxu0 0.0
    %1462 = vmatprep.subr.mxu0 0.0
    %1463 = vmatpush2.msra.mxu0 0.0
    %1464 = vmatprep.subr.mxu0 0.0
    %1465 = vmatpush2.msra.mxu0 0.0
    %1466 = vmatprep.mubr.f32.mxu0 0.0
    %1467 = vmatmul.mubr.f32.gmra.mxu0 %v1400
    %v1468 = vpop.f32.mrf.mxu0
    %v1469 = vadd.f32 0.0, %v1468
    %v1470 = vpop.f32.mrf.mxu0
    %1471 = vdwg.mxu0
    %v1472 = vld [vmem:[%s2] sm:$0xff]
    %v1473 = vld [vmem:[%s2 + $0x8] sm:$0xff]
    %v1474 = vld [vmem:[%s2 + $0x10] sm:$0xff]
    %v1475 = vld [vmem:[%s2 + $0x18] sm:$0xff]
    %v1476 = vld [vmem:[%s2 + $0x20] sm:$0xff]
    %v1477 = vld [vmem:[%s2 + $0x28] sm:$0xff]
    %v1478 = vld [vmem:[%s2 + $0x30] sm:$0xff]
    %v1479 = vld [vmem:[%s2 + $0x38] sm:$0xff]
    %v1481 = vsel %vm161, %v937, 0
    %1483 = vmatprep.subr.mxu0 0.0
    %1484 = vmatpush1.msra.mxu0 0.0
    %1485 = vmatprep.subr.mxu0 0.0
    %1486 = vmatpush1.msra.mxu0 0.0
    %1487 = vmatprep.subr.mxu0 0.0
    %1488 = vmatpush1.msra.mxu0 0.0
    %1489 = vmatprep.subr.mxu0 0.0
    %1490 = vmatpush1.msra.mxu0 0.0
    %1491 = vmatprep.subr.mxu0 0.0
    %1492 = vmatpush1.msra.mxu0 0.0
    %1493 = vmatprep.subr.mxu0 0.0
    %1494 = vmatpush1.msra.mxu0 0.0
    %1495 = vmatprep.subr.mxu0 0.0
    %1496 = vmatpush1.msra.mxu0 0.0
    %1497 = vmatprep.subr.mxu0 0.0
    %1498 = vmatpush1.msra.mxu0 0.0
    %1499 = vmatprep.subr.mxu0 0.0
    %1500 = vmatpush1.msra.mxu0 0.0
    %1501 = vmatprep.subr.mxu0 0.0
    %1502 = vmatpush1.msra.mxu0 0.0
    %1503 = vmatprep.subr.mxu0 0.0
    %1504 = vmatpush1.msra.mxu0 0.0
    %1505 = vmatprep.subr.mxu0 0.0
    %1506 = vmatpush1.msra.mxu0 0.0
    %1507 = vmatprep.subr.mxu0 0.0
    %1508 = vmatpush1.msra.mxu0 0.0
    %1509 = vmatprep.subr.mxu0 0.0
    %1510 = vmatpush1.msra.mxu0 0.0
    %1511 = vmatprep.subr.mxu0 0.0
    %1512 = vmatpush1.msra.mxu0 0.0
    %1513 = vmatprep.subr.mxu0 0.0
    %1514 = vmatpush1.msra.mxu0 %v1472
    %1515 = vmatprep.subr.mxu0 0.0
    %1516 = vmatpush2.msra.mxu0 0.0
    %1517 = vmatprep.subr.mxu0 0.0
    %1518 = vmatpush2.msra.mxu0 0.0
    %1519 = vmatprep.subr.mxu0 0.0
    %1520 = vmatpush2.msra.mxu0 0.0
    %1521 = vmatprep.subr.mxu0 0.0
    %1522 = vmatpush2.msra.mxu0 0.0
    %1523 = vmatprep.subr.mxu0 0.0
    %1524 = vmatpush2.msra.mxu0 0.0
    %1525 = vmatprep.subr.mxu0 0.0
    %1526 = vmatpush2.msra.mxu0 0.0
    %1527 = vmatprep.subr.mxu0 0.0
    %1528 = vmatpush2.msra.mxu0 0.0
    %1529 = vmatprep.subr.mxu0 0.0
    %1530 = vmatpush2.msra.mxu0 0.0
    %1531 = vmatprep.subr.mxu0 0.0
    %1532 = vmatpush2.msra.mxu0 0.0
    %1533 = vmatprep.subr.mxu0 0.0
    %1534 = vmatpush2.msra.mxu0 0.0
    %1535 = vmatprep.subr.mxu0 0.0
    %1536 = vmatpush2.msra.mxu0 0.0
    %1537 = vmatprep.subr.mxu0 0.0
    %1538 = vmatpush2.msra.mxu0 0.0
    %1539 = vmatprep.subr.mxu0 0.0
    %1540 = vmatpush2.msra.mxu0 0.0
    %1541 = vmatprep.subr.mxu0 0.0
    %1542 = vmatpush2.msra.mxu0 0.0
    %1543 = vmatprep.subr.mxu0 0.0
    %1544 = vmatpush2.msra.mxu0 0.0
    %1545 = vmatprep.subr.mxu0 0.0
    %1546 = vmatpush2.msra.mxu0 0.0
    %1547 = vmatprep.mubr.f32.mxu0 0.0
    %1548 = vmatmul.mubr.f32.gmra.mxu0 %v1481
    %v1549 = vpop.f32.mrf.mxu0
    %v1550 = vadd.f32 0.0, %v1549
    %v1551 = vpop.f32.mrf.mxu0
    %1552 = vdwg.mxu0
    %v1554 = vsel %vm161, %v1013, 0
    %1556 = vmatprep.subr.mxu0 0.0
    %1557 = vmatpush1.msra.mxu0 0.0
    %1558 = vmatprep.subr.mxu0 0.0
    %1559 = vmatpush1.msra.mxu0 0.0
    %1560 = vmatprep.subr.mxu0 0.0
    %1561 = vmatpush1.msra.mxu0 0.0
    %1562 = vmatprep.subr.mxu0 0.0
    %1563 = vmatpush1.msra.mxu0 0.0
    %1564 = vmatprep.subr.mxu0 0.0
    %1565 = vmatpush1.msra.mxu0 0.0
    %1566 = vmatprep.subr.mxu0 0.0
    %1567 = vmatpush1.msra.mxu0 0.0
    %1568 = vmatprep.subr.mxu0 0.0
    %1569 = vmatpush1.msra.mxu0 0.0
    %1570 = vmatprep.subr.mxu0 0.0
    %1571 = vmatpush1.msra.mxu0 0.0
    %1572 = vmatprep.subr.mxu0 0.0
    %1573 = vmatpush1.msra.mxu0 0.0
    %1574 = vmatprep.subr.mxu0 0.0
    %1575 = vmatpush1.msra.mxu0 0.0
    %1576 = vmatprep.subr.mxu0 0.0
    %1577 = vmatpush1.msra.mxu0 0.0
    %1578 = vmatprep.subr.mxu0 0.0
    %1579 = vmatpush1.msra.mxu0 0.0
    %1580 = vmatprep.subr.mxu0 0.0
    %1581 = vmatpush1.msra.mxu0 0.0
    %1582 = vmatprep.subr.mxu0 0.0
    %1583 = vmatpush1.msra.mxu0 0.0
    %1584 = vmatprep.subr.mxu0 0.0
    %1585 = vmatpush1.msra.mxu0 0.0
    %1586 = vmatprep.subr.mxu0 0.0
    %1587 = vmatpush1.msra.mxu0 %v1473
    %1588 = vmatprep.subr.mxu0 0.0
    %1589 = vmatpush2.msra.mxu0 0.0
    %1590 = vmatprep.subr.mxu0 0.0
    %1591 = vmatpush2.msra.mxu0 0.0
    %1592 = vmatprep.subr.mxu0 0.0
    %1593 = vmatpush2.msra.mxu0 0.0
    %1594 = vmatprep.subr.mxu0 0.0
    %1595 = vmatpush2.msra.mxu0 0.0
    %1596 = vmatprep.subr.mxu0 0.0
    %1597 = vmatpush2.msra.mxu0 0.0
    %1598 = vmatprep.subr.mxu0 0.0
    %1599 = vmatpush2.msra.mxu0 0.0
    %1600 = vmatprep.subr.mxu0 0.0
    %1601 = vmatpush2.msra.mxu0 0.0
    %1602 = vmatprep.subr.mxu0 0.0
    %1603 = vmatpush2.msra.mxu0 0.0
    %1604 = vmatprep.subr.mxu0 0.0
    %1605 = vmatpush2.msra.mxu0 0.0
    %1606 = vmatprep.subr.mxu0 0.0
    %1607 = vmatpush2.msra.mxu0 0.0
    %1608 = vmatprep.subr.mxu0 0.0
    %1609 = vmatpush2.msra.mxu0 0.0
    %1610 = vmatprep.subr.mxu0 0.0
    %1611 = vmatpush2.msra.mxu0 0.0
    %1612 = vmatprep.subr.mxu0 0.0
    %1613 = vmatpush2.msra.mxu0 0.0
    %1614 = vmatprep.subr.mxu0 0.0
    %1615 = vmatpush2.msra.mxu0 0.0
    %1616 = vmatprep.subr.mxu0 0.0
    %1617 = vmatpush2.msra.mxu0 0.0
    %1618 = vmatprep.subr.mxu0 0.0
    %1619 = vmatpush2.msra.mxu0 0.0
    %1620 = vmatprep.mubr.f32.mxu0 0.0
    %1621 = vmatmul.mubr.f32.gmra.mxu0 %v1554
    %v1622 = vpop.f32.mrf.mxu0
    %v1623 = vadd.f32 0.0, %v1622
    %v1624 = vpop.f32.mrf.mxu0
    %1625 = vdwg.mxu0
    %v1627 = vsel %vm161, %v1089, 0
    %1629 = vmatprep.subr.mxu0 0.0
    %1630 = vmatpush1.msra.mxu0 0.0
    %1631 = vmatprep.subr.mxu0 0.0
    %1632 = vmatpush1.msra.mxu0 0.0
    %1633 = vmatprep.subr.mxu0 0.0
    %1634 = vmatpush1.msra.mxu0 0.0
    %1635 = vmatprep.subr.mxu0 0.0
    %1636 = vmatpush1.msra.mxu0 0.0
    %1637 = vmatprep.subr.mxu0 0.0
    %1638 = vmatpush1.msra.mxu0 0.0
    %1639 = vmatprep.subr.mxu0 0.0
    %1640 = vmatpush1.msra.mxu0 0.0
    %1641 = vmatprep.subr.mxu0 0.0
    %1642 = vmatpush1.msra.mxu0 0.0
    %1643 = vmatprep.subr.mxu0 0.0
    %1644 = vmatpush1.msra.mxu0 0.0
    %1645 = vmatprep.subr.mxu0 0.0
    %1646 = vmatpush1.msra.mxu0 0.0
    %1647 = vmatprep.subr.mxu0 0.0
    %1648 = vmatpush1.msra.mxu0 0.0
    %1649 = vmatprep.subr.mxu0 0.0
    %1650 = vmatpush1.msra.mxu0 0.0
    %1651 = vmatprep.subr.mxu0 0.0
    %1652 = vmatpush1.msra.mxu0 0.0
    %1653 = vmatprep.subr.mxu0 0.0
    %1654 = vmatpush1.msra.mxu0 0.0
    %1655 = vmatprep.subr.mxu0 0.0
    %1656 = vmatpush1.msra.mxu0 0.0
    %1657 = vmatprep.subr.mxu0 0.0
    %1658 = vmatpush1.msra.mxu0 0.0
    %1659 = vmatprep.subr.mxu0 0.0
    %1660 = vmatpush1.msra.mxu0 %v1474
    %1661 = vmatprep.subr.mxu0 0.0
    %1662 = vmatpush2.msra.mxu0 0.0
    %1663 = vmatprep.subr.mxu0 0.0
    %1664 = vmatpush2.msra.mxu0 0.0
    %1665 = vmatprep.subr.mxu0 0.0
    %1666 = vmatpush2.msra.mxu0 0.0
    %1667 = vmatprep.subr.mxu0 0.0
    %1668 = vmatpush2.msra.mxu0 0.0
    %1669 = vmatprep.subr.mxu0 0.0
    %1670 = vmatpush2.msra.mxu0 0.0
    %1671 = vmatprep.subr.mxu0 0.0
    %1672 = vmatpush2.msra.mxu0 0.0
    %1673 = vmatprep.subr.mxu0 0.0
    %1674 = vmatpush2.msra.mxu0 0.0
    %1675 = vmatprep.subr.mxu0 0.0
    %1676 = vmatpush2.msra.mxu0 0.0
    %1677 = vmatprep.subr.mxu0 0.0
    %1678 = vmatpush2.msra.mxu0 0.0
    %1679 = vmatprep.subr.mxu0 0.0
    %1680 = vmatpush2.msra.mxu0 0.0
    %1681 = vmatprep.subr.mxu0 0.0
    %1682 = vmatpush2.msra.mxu0 0.0
    %1683 = vmatprep.subr.mxu0 0.0
    %1684 = vmatpush2.msra.mxu0 0.0
    %1685 = vmatprep.subr.mxu0 0.0
    %1686 = vmatpush2.msra.mxu0 0.0
    %1687 = vmatprep.subr.mxu0 0.0
    %1688 = vmatpush2.msra.mxu0 0.0
    %1689 = vmatprep.subr.mxu0 0.0
    %1690 = vmatpush2.msra.mxu0 0.0
    %1691 = vmatprep.subr.mxu0 0.0
    %1692 = vmatpush2.msra.mxu0 0.0
    %1693 = vmatprep.mubr.f32.mxu0 0.0
    %1694 = vmatmul.mubr.f32.gmra.mxu0 %v1627
    %v1695 = vpop.f32.mrf.mxu0
    %v1696 = vadd.f32 0.0, %v1695
    %v1697 = vpop.f32.mrf.mxu0
    %1698 = vdwg.mxu0
    %v1700 = vsel %vm161, %v1165, 0
    %1702 = vmatprep.subr.mxu0 0.0
    %1703 = vmatpush1.msra.mxu0 0.0
    %1704 = vmatprep.subr.mxu0 0.0
    %1705 = vmatpush1.msra.mxu0 0.0
    %1706 = vmatprep.subr.mxu0 0.0
    %1707 = vmatpush1.msra.mxu0 0.0
    %1708 = vmatprep.subr.mxu0 0.0
    %1709 = vmatpush1.msra.mxu0 0.0
    %1710 = vmatprep.subr.mxu0 0.0
    %1711 = vmatpush1.msra.mxu0 0.0
    %1712 = vmatprep.subr.mxu0 0.0
    %1713 = vmatpush1.msra.mxu0 0.0
    %1714 = vmatprep.subr.mxu0 0.0
    %1715 = vmatpush1.msra.mxu0 0.0
    %1716 = vmatprep.subr.mxu0 0.0
    %1717 = vmatpush1.msra.mxu0 0.0
    %1718 = vmatprep.subr.mxu0 0.0
    %1719 = vmatpush1.msra.mxu0 0.0
    %1720 = vmatprep.subr.mxu0 0.0
    %1721 = vmatpush1.msra.mxu0 0.0
    %1722 = vmatprep.subr.mxu0 0.0
    %1723 = vmatpush1.msra.mxu0 0.0
    %1724 = vmatprep.subr.mxu0 0.0
    %1725 = vmatpush1.msra.mxu0 0.0
    %1726 = vmatprep.subr.mxu0 0.0
    %1727 = vmatpush1.msra.mxu0 0.0
    %1728 = vmatprep.subr.mxu0 0.0
    %1729 = vmatpush1.msra.mxu0 0.0
    %1730 = vmatprep.subr.mxu0 0.0
    %1731 = vmatpush1.msra.mxu0 0.0
    %1732 = vmatprep.subr.mxu0 0.0
    %1733 = vmatpush1.msra.mxu0 %v1475
    %1734 = vmatprep.subr.mxu0 0.0
    %1735 = vmatpush2.msra.mxu0 0.0
    %1736 = vmatprep.subr.mxu0 0.0
    %1737 = vmatpush2.msra.mxu0 0.0
    %1738 = vmatprep.subr.mxu0 0.0
    %1739 = vmatpush2.msra.mxu0 0.0
    %1740 = vmatprep.subr.mxu0 0.0
    %1741 = vmatpush2.msra.mxu0 0.0
    %1742 = vmatprep.subr.mxu0 0.0
    %1743 = vmatpush2.msra.mxu0 0.0
    %1744 = vmatprep.subr.mxu0 0.0
    %1745 = vmatpush2.msra.mxu0 0.0
    %1746 = vmatprep.subr.mxu0 0.0
    %1747 = vmatpush2.msra.mxu0 0.0
    %1748 = vmatprep.subr.mxu0 0.0
    %1749 = vmatpush2.msra.mxu0 0.0
    %1750 = vmatprep.subr.mxu0 0.0
    %1751 = vmatpush2.msra.mxu0 0.0
    %1752 = vmatprep.subr.mxu0 0.0
    %1753 = vmatpush2.msra.mxu0 0.0
    %1754 = vmatprep.subr.mxu0 0.0
    %1755 = vmatpush2.msra.mxu0 0.0
    %1756 = vmatprep.subr.mxu0 0.0
    %1757 = vmatpush2.msra.mxu0 0.0
    %1758 = vmatprep.subr.mxu0 0.0
    %1759 = vmatpush2.msra.mxu0 0.0
    %1760 = vmatprep.subr.mxu0 0.0
    %1761 = vmatpush2.msra.mxu0 0.0
    %1762 = vmatprep.subr.mxu0 0.0
    %1763 = vmatpush2.msra.mxu0 0.0
    %1764 = vmatprep.subr.mxu0 0.0
    %1765 = vmatpush2.msra.mxu0 0.0
    %1766 = vmatprep.mubr.f32.mxu0 0.0
    %1767 = vmatmul.mubr.f32.gmra.mxu0 %v1700
    %v1768 = vpop.f32.mrf.mxu0
    %v1769 = vadd.f32 0.0, %v1768
    %v1770 = vpop.f32.mrf.mxu0
    %1771 = vdwg.mxu0
    %v1773 = vsel %vm161, %v1241, 0
    %1775 = vmatprep.subr.mxu0 0.0
    %1776 = vmatpush1.msra.mxu0 0.0
    %1777 = vmatprep.subr.mxu0 0.0
    %1778 = vmatpush1.msra.mxu0 0.0
    %1779 = vmatprep.subr.mxu0 0.0
    %1780 = vmatpush1.msra.mxu0 0.0
    %1781 = vmatprep.subr.mxu0 0.0
    %1782 = vmatpush1.msra.mxu0 0.0
    %1783 = vmatprep.subr.mxu0 0.0
    %1784 = vmatpush1.msra.mxu0 0.0
    %1785 = vmatprep.subr.mxu0 0.0
    %1786 = vmatpush1.msra.mxu0 0.0
    %1787 = vmatprep.subr.mxu0 0.0
    %1788 = vmatpush1.msra.mxu0 0.0
    %1789 = vmatprep.subr.mxu0 0.0
    %1790 = vmatpush1.msra.mxu0 0.0
    %1791 = vmatprep.subr.mxu0 0.0
    %1792 = vmatpush1.msra.mxu0 0.0
    %1793 = vmatprep.subr.mxu0 0.0
    %1794 = vmatpush1.msra.mxu0 0.0
    %1795 = vmatprep.subr.mxu0 0.0
    %1796 = vmatpush1.msra.mxu0 0.0
    %1797 = vmatprep.subr.mxu0 0.0
    %1798 = vmatpush1.msra.mxu0 0.0
    %1799 = vmatprep.subr.mxu0 0.0
    %1800 = vmatpush1.msra.mxu0 0.0
    %1801 = vmatprep.subr.mxu0 0.0
    %1802 = vmatpush1.msra.mxu0 0.0
    %1803 = vmatprep.subr.mxu0 0.0
    %1804 = vmatpush1.msra.mxu0 0.0
    %1805 = vmatprep.subr.mxu0 0.0
    %1806 = vmatpush1.msra.mxu0 %v1476
    %1807 = vmatprep.subr.mxu0 0.0
    %1808 = vmatpush2.msra.mxu0 0.0
    %1809 = vmatprep.subr.mxu0 0.0
    %1810 = vmatpush2.msra.mxu0 0.0
    %1811 = vmatprep.subr.mxu0 0.0
    %1812 = vmatpush2.msra.mxu0 0.0
    %1813 = vmatprep.subr.mxu0 0.0
    %1814 = vmatpush2.msra.mxu0 0.0
    %1815 = vmatprep.subr.mxu0 0.0
    %1816 = vmatpush2.msra.mxu0 0.0
    %1817 = vmatprep.subr.mxu0 0.0
    %1818 = vmatpush2.msra.mxu0 0.0
    %1819 = vmatprep.subr.mxu0 0.0
    %1820 = vmatpush2.msra.mxu0 0.0
    %1821 = vmatprep.subr.mxu0 0.0
    %1822 = vmatpush2.msra.mxu0 0.0
    %1823 = vmatprep.subr.mxu0 0.0
    %1824 = vmatpush2.msra.mxu0 0.0
    %1825 = vmatprep.subr.mxu0 0.0
    %1826 = vmatpush2.msra.mxu0 0.0
    %1827 = vmatprep.subr.mxu0 0.0
    %1828 = vmatpush2.msra.mxu0 0.0
    %1829 = vmatprep.subr.mxu0 0.0
    %1830 = vmatpush2.msra.mxu0 0.0
    %1831 = vmatprep.subr.mxu0 0.0
    %1832 = vmatpush2.msra.mxu0 0.0
    %1833 = vmatprep.subr.mxu0 0.0
    %1834 = vmatpush2.msra.mxu0 0.0
    %1835 = vmatprep.subr.mxu0 0.0
    %1836 = vmatpush2.msra.mxu0 0.0
    %1837 = vmatprep.subr.mxu0 0.0
    %1838 = vmatpush2.msra.mxu0 0.0
    %1839 = vmatprep.mubr.f32.mxu0 0.0
    %1840 = vmatmul.mubr.f32.gmra.mxu0 %v1773
    %v1841 = vpop.f32.mrf.mxu0
    %v1842 = vadd.f32 0.0, %v1841
    %v1843 = vpop.f32.mrf.mxu0
    %1844 = vdwg.mxu0
    %v1846 = vsel %vm161, %v1317, 0
    %1848 = vmatprep.subr.mxu0 0.0
    %1849 = vmatpush1.msra.mxu0 0.0
    %1850 = vmatprep.subr.mxu0 0.0
    %1851 = vmatpush1.msra.mxu0 0.0
    %1852 = vmatprep.subr.mxu0 0.0
    %1853 = vmatpush1.msra.mxu0 0.0
    %1854 = vmatprep.subr.mxu0 0.0
    %1855 = vmatpush1.msra.mxu0 0.0
    %1856 = vmatprep.subr.mxu0 0.0
    %1857 = vmatpush1.msra.mxu0 0.0
    %1858 = vmatprep.subr.mxu0 0.0
    %1859 = vmatpush1.msra.mxu0 0.0
    %1860 = vmatprep.subr.mxu0 0.0
    %1861 = vmatpush1.msra.mxu0 0.0
    %1862 = vmatprep.subr.mxu0 0.0
    %1863 = vmatpush1.msra.mxu0 0.0
    %1864 = vmatprep.subr.mxu0 0.0
    %1865 = vmatpush1.msra.mxu0 0.0
    %1866 = vmatprep.subr.mxu0 0.0
    %1867 = vmatpush1.msra.mxu0 0.0
    %1868 = vmatprep.subr.mxu0 0.0
    %1869 = vmatpush1.msra.mxu0 0.0
    %1870 = vmatprep.subr.mxu0 0.0
    %1871 = vmatpush1.msra.mxu0 0.0
    %1872 = vmatprep.subr.mxu0 0.0
    %1873 = vmatpush1.msra.mxu0 0.0
    %1874 = vmatprep.subr.mxu0 0.0
    %1875 = vmatpush1.msra.mxu0 0.0
    %1876 = vmatprep.subr.mxu0 0.0
    %1877 = vmatpush1.msra.mxu0 0.0
    %1878 = vmatprep.subr.mxu0 0.0
    %1879 = vmatpush1.msra.mxu0 %v1477
    %1880 = vmatprep.subr.mxu0 0.0
    %1881 = vmatpush2.msra.mxu0 0.0
    %1882 = vmatprep.subr.mxu0 0.0
    %1883 = vmatpush2.msra.mxu0 0.0
    %1884 = vmatprep.subr.mxu0 0.0
    %1885 = vmatpush2.msra.mxu0 0.0
    %1886 = vmatprep.subr.mxu0 0.0
    %1887 = vmatpush2.msra.mxu0 0.0
    %1888 = vmatprep.subr.mxu0 0.0
    %1889 = vmatpush2.msra.mxu0 0.0
    %1890 = vmatprep.subr.mxu0 0.0
    %1891 = vmatpush2.msra.mxu0 0.0
    %1892 = vmatprep.subr.mxu0 0.0
    %1893 = vmatpush2.msra.mxu0 0.0
    %1894 = vmatprep.subr.mxu0 0.0
    %1895 = vmatpush2.msra.mxu0 0.0
    %1896 = vmatprep.subr.mxu0 0.0
    %1897 = vmatpush2.msra.mxu0 0.0
    %1898 = vmatprep.subr.mxu0 0.0
    %1899 = vmatpush2.msra.mxu0 0.0
    %1900 = vmatprep.subr.mxu0 0.0
    %1901 = vmatpush2.msra.mxu0 0.0
    %1902 = vmatprep.subr.mxu0 0.0
    %1903 = vmatpush2.msra.mxu0 0.0
    %1904 = vmatprep.subr.mxu0 0.0
    %1905 = vmatpush2.msra.mxu0 0.0
    %1906 = vmatprep.subr.mxu0 0.0
    %1907 = vmatpush2.msra.mxu0 0.0
    %1908 = vmatprep.subr.mxu0 0.0
    %1909 = vmatpush2.msra.mxu0 0.0
    %1910 = vmatprep.subr.mxu0 0.0
    %1911 = vmatpush2.msra.mxu0 0.0
    %1912 = vmatprep.mubr.f32.mxu0 0.0
    %1913 = vmatmul.mubr.f32.gmra.mxu0 %v1846
    %v1914 = vpop.f32.mrf.mxu0
    %v1915 = vadd.f32 0.0, %v1914
    %v1916 = vpop.f32.mrf.mxu0
    %1917 = vdwg.mxu0
    %v1919 = vsel %vm161, %v1393, 0
    %1921 = vmatprep.subr.mxu0 0.0
    %1922 = vmatpush1.msra.mxu0 0.0
    %1923 = vmatprep.subr.mxu0 0.0
    %1924 = vmatpush1.msra.mxu0 0.0
    %1925 = vmatprep.subr.mxu0 0.0
    %1926 = vmatpush1.msra.mxu0 0.0
    %1927 = vmatprep.subr.mxu0 0.0
    %1928 = vmatpush1.msra.mxu0 0.0
    %1929 = vmatprep.subr.mxu0 0.0
    %1930 = vmatpush1.msra.mxu0 0.0
    %1931 = vmatprep.subr.mxu0 0.0
    %1932 = vmatpush1.msra.mxu0 0.0
    %1933 = vmatprep.subr.mxu0 0.0
    %1934 = vmatpush1.msra.mxu0 0.0
    %1935 = vmatprep.subr.mxu0 0.0
    %1936 = vmatpush1.msra.mxu0 0.0
    %1937 = vmatprep.subr.mxu0 0.0
    %1938 = vmatpush1.msra.mxu0 0.0
    %1939 = vmatprep.subr.mxu0 0.0
    %1940 = vmatpush1.msra.mxu0 0.0
    %1941 = vmatprep.subr.mxu0 0.0
    %1942 = vmatpush1.msra.mxu0 0.0
    %1943 = vmatprep.subr.mxu0 0.0
    %1944 = vmatpush1.msra.mxu0 0.0
    %1945 = vmatprep.subr.mxu0 0.0
    %1946 = vmatpush1.msra.mxu0 0.0
    %1947 = vmatprep.subr.mxu0 0.0
    %1948 = vmatpush1.msra.mxu0 0.0
    %1949 = vmatprep.subr.mxu0 0.0
    %1950 = vmatpush1.msra.mxu0 0.0
    %1951 = vmatprep.subr.mxu0 0.0
    %1952 = vmatpush1.msra.mxu0 %v1478
    %1953 = vmatprep.subr.mxu0 0.0
    %1954 = vmatpush2.msra.mxu0 0.0
    %1955 = vmatprep.subr.mxu0 0.0
    %1956 = vmatpush2.msra.mxu0 0.0
    %1957 = vmatprep.subr.mxu0 0.0
    %1958 = vmatpush2.msra.mxu0 0.0
    %1959 = vmatprep.subr.mxu0 0.0
    %1960 = vmatpush2.msra.mxu0 0.0
    %1961 = vmatprep.subr.mxu0 0.0
    %1962 = vmatpush2.msra.mxu0 0.0
    %1963 = vmatprep.subr.mxu0 0.0
    %1964 = vmatpush2.msra.mxu0 0.0
    %1965 = vmatprep.subr.mxu0 0.0
    %1966 = vmatpush2.msra.mxu0 0.0
    %1967 = vmatprep.subr.mxu0 0.0
    %1968 = vmatpush2.msra.mxu0 0.0
    %1969 = vmatprep.subr.mxu0 0.0
    %1970 = vmatpush2.msra.mxu0 0.0
    %1971 = vmatprep.subr.mxu0 0.0
    %1972 = vmatpush2.msra.mxu0 0.0
    %1973 = vmatprep.subr.mxu0 0.0
    %1974 = vmatpush2.msra.mxu0 0.0
    %1975 = vmatprep.subr.mxu0 0.0
    %1976 = vmatpush2.msra.mxu0 0.0
    %1977 = vmatprep.subr.mxu0 0.0
    %1978 = vmatpush2.msra.mxu0 0.0
    %1979 = vmatprep.subr.mxu0 0.0
    %1980 = vmatpush2.msra.mxu0 0.0
    %1981 = vmatprep.subr.mxu0 0.0
    %1982 = vmatpush2.msra.mxu0 0.0
    %1983 = vmatprep.subr.mxu0 0.0
    %1984 = vmatpush2.msra.mxu0 0.0
    %1985 = vmatprep.mubr.f32.mxu0 0.0
    %1986 = vmatmul.mubr.f32.gmra.mxu0 %v1919
    %v1987 = vpop.f32.mrf.mxu0
    %v1988 = vadd.f32 0.0, %v1987
    %v1989 = vpop.f32.mrf.mxu0
    %1990 = vdwg.mxu0
    %v1992 = vsel %vm161, %v1469, 0
    %1994 = vmatprep.subr.mxu0 0.0
    %1995 = vmatpush1.msra.mxu0 0.0
    %1996 = vmatprep.subr.mxu0 0.0
    %1997 = vmatpush1.msra.mxu0 0.0
    %1998 = vmatprep.subr.mxu0 0.0
    %1999 = vmatpush1.msra.mxu0 0.0
    %2000 = vmatprep.subr.mxu0 0.0
    %2001 = vmatpush1.msra.mxu0 0.0
    %2002 = vmatprep.subr.mxu0 0.0
    %2003 = vmatpush1.msra.mxu0 0.0
    %2004 = vmatprep.subr.mxu0 0.0
    %2005 = vmatpush1.msra.mxu0 0.0
    %2006 = vmatprep.subr.mxu0 0.0
    %2007 = vmatpush1.msra.mxu0 0.0
    %2008 = vmatprep.subr.mxu0 0.0
    %2009 = vmatpush1.msra.mxu0 0.0
    %2010 = vmatprep.subr.mxu0 0.0
    %2011 = vmatpush1.msra.mxu0 0.0
    %2012 = vmatprep.subr.mxu0 0.0
    %2013 = vmatpush1.msra.mxu0 0.0
    %2014 = vmatprep.subr.mxu0 0.0
    %2015 = vmatpush1.msra.mxu0 0.0
    %2016 = vmatprep.subr.mxu0 0.0
    %2017 = vmatpush1.msra.mxu0 0.0
    %2018 = vmatprep.subr.mxu0 0.0
    %2019 = vmatpush1.msra.mxu0 0.0
    %2020 = vmatprep.subr.mxu0 0.0
    %2021 = vmatpush1.msra.mxu0 0.0
    %2022 = vmatprep.subr.mxu0 0.0
    %2023 = vmatpush1.msra.mxu0 0.0
    %2024 = vmatprep.subr.mxu0 0.0
    %2025 = vmatpush1.msra.mxu0 %v1479
    %2026 = vmatprep.subr.mxu0 0.0
    %2027 = vmatpush2.msra.mxu0 0.0
    %2028 = vmatprep.subr.mxu0 0.0
    %2029 = vmatpush2.msra.mxu0 0.0
    %2030 = vmatprep.subr.mxu0 0.0
    %2031 = vmatpush2.msra.mxu0 0.0
    %2032 = vmatprep.subr.mxu0 0.0
    %2033 = vmatpush2.msra.mxu0 0.0
    %2034 = vmatprep.subr.mxu0 0.0
    %2035 = vmatpush2.msra.mxu0 0.0
    %2036 = vmatprep.subr.mxu0 0.0
    %2037 = vmatpush2.msra.mxu0 0.0
    %2038 = vmatprep.subr.mxu0 0.0
    %2039 = vmatpush2.msra.mxu0 0.0
    %2040 = vmatprep.subr.mxu0 0.0
    %2041 = vmatpush2.msra.mxu0 0.0
    %2042 = vmatprep.subr.mxu0 0.0
    %2043 = vmatpush2.msra.mxu0 0.0
    %2044 = vmatprep.subr.mxu0 0.0
    %2045 = vmatpush2.msra.mxu0 0.0
    %2046 = vmatprep.subr.mxu0 0.0
    %2047 = vmatpush2.msra.mxu0 0.0
    %2048 = vmatprep.subr.mxu0 0.0
    %2049 = vmatpush2.msra.mxu0 0.0
    %2050 = vmatprep.subr.mxu0 0.0
    %2051 = vmatpush2.msra.mxu0 0.0
    %2052 = vmatprep.subr.mxu0 0.0
    %2053 = vmatpush2.msra.mxu0 0.0
    %2054 = vmatprep.subr.mxu0 0.0
    %2055 = vmatpush2.msra.mxu0 0.0
    %2056 = vmatprep.subr.mxu0 0.0
    %2057 = vmatpush2.msra.mxu0 0.0
    %2058 = vmatprep.mubr.f32.mxu0 0.0
    %2059 = vmatmul.mubr.f32.gmra.mxu0 %v1992
    %v2060 = vpop.f32.mrf.mxu0
    %v2061 = vadd.f32 0.0, %v2060
    %v2062 = vpop.f32.mrf.mxu0
    %2063 = vdwg.mxu0
    %v2064 = vadd.f32 %v1550, %v1696
    %v2065 = vadd.f32 %v1623, %v1769
    %v2066 = vadd.f32 %v2064, %v1842
    %v2067 = vadd.f32 %v2065, %v1915
    %v2068 = vadd.f32 %v2066, %v1988
    %v2069 = vadd.f32 %v2067, %v2061
    %v2070 = vlaneseq
    %v2071 = vshrl.u32 %v2070, 7
    %v2072 = vsub.s32 2, %v2071
    %v2073 = vrot.slane %v54, %v2072
    %v2074 = vadd.f32 %v2068, %v2073
    %v2075 = vadd.f32 %v2069, %v2073
    %v2076 = vadd.f32 %v52, %v2074
    %v2077 = vadd.f32 %v53, %v2075
    %v2078 = vsel %vm63, %v2076, 0.0
    %2079 = vadd.xlane.f32.xlu0 %v2078
    %v2080 = vpop.xlane.xlu0 %2079
    %v2081 = vsel %vm63, %v2077, 0.0
    %2082 = vadd.xlane.f32.xlu0 %v2081
    %v2083 = vpop.xlane.xlu0 %2082
    %v2084 = vrcp.pop 32.0
    %v2085 = vmul.f32 %v2080, %v2084
    %v2086 = vmul.f32 %v2083, %v2084
    %v2087 = vsub.f32 %v2076, %v2085
    %v2088 = vsub.f32 %v2077, %v2086
    %v2089 = vmul.f32 %v2087, %v2087
    %v2090 = vmul.f32 %v2088, %v2088
    %v2091 = vsel %vm63, %v2089, 0.0
    %2092 = vadd.xlane.f32.xlu0 %v2091
    %v2093 = vpop.xlane.xlu0 %2092
    %v2094 = vsel %vm63, %v2090, 0.0
    %2095 = vadd.xlane.f32.xlu0 %v2094
    %v2096 = vpop.xlane.xlu0 %2095
    %v2097 = vmul.f32 %v2093, %v2084
    %v2098 = vmul.f32 %v2096, %v2084
    %v2099 = vadd.f32 %v2097, 1e-05
    %v2100 = vadd.f32 %v2098, 1e-05
    %v2101 = vrsqrt.pop %v2099
    %v2102 = vrsqrt.pop %v2100
    %v2103 = vmul.f32 %v2087, %v2101
    %v2104 = vmul.f32 %v2088, %v2102
    %v2105 = vlaneseq
    %v2106 = vshrl.u32 %v2105, 7
    %v2107 = vsub.s32 3, %v2106
    %v2108 = vrot.slane %v54, %v2107
    %v2109 = vmul.f32 %v2103, %v2108
    %v2110 = vmul.f32 %v2104, %v2108
    %v2111 = vlaneseq
    %v2112 = vshrl.u32 %v2111, 7
    %v2113 = vsub.s32 4, %v2112
    %v2114 = vrot.slane %v54, %v2113
    %v2115 = vadd.f32 %v2109, %v2114
    %v2116 = vadd.f32 %v2110, %v2114
    %v2117 = vld [vmem:[#allocation5] sm:$0xff]
    %v2118 = vld [vmem:[#allocation5 + $0x8] sm:$0xff]
    %v2119 = vld [vmem:[#allocation5 + $0x10] sm:$0xff]
    %v2120 = vld [vmem:[#allocation5 + $0x18] sm:$0xff]
    %v2121 = vlaneseq
    %v2122 = vshrl.u32 %v2121, 7
    %v2123 = vsub.s32 1, %v2122
    %v2124 = vrot.slane %v54, %v2123
    %v2126 = vsel %vm63, %v2115, 0
    %v2129 = vsel %vm63, %v2116, 0
    %2131 = vmatprep.subr.mxu0 0.0
    %2132 = vmatpush1.msra.mxu0 0.0
    %2133 = vmatprep.subr.mxu0 0.0
    %2134 = vmatpush1.msra.mxu0 0.0
    %2135 = vmatprep.subr.mxu0 0.0
    %2136 = vmatpush1.msra.mxu0 0.0
    %2137 = vmatprep.subr.mxu0 0.0
    %2138 = vmatpush1.msra.mxu0 0.0
    %2139 = vmatprep.subr.mxu0 0.0
    %2140 = vmatpush1.msra.mxu0 0.0
    %2141 = vmatprep.subr.mxu0 0.0
    %2142 = vmatpush1.msra.mxu0 0.0
    %2143 = vmatprep.subr.mxu0 0.0
    %2144 = vmatpush1.msra.mxu0 0.0
    %2145 = vmatprep.subr.mxu0 0.0
    %2146 = vmatpush1.msra.mxu0 0.0
    %2147 = vmatprep.subr.mxu0 0.0
    %2148 = vmatpush1.msra.mxu0 0.0
    %2149 = vmatprep.subr.mxu0 0.0
    %2150 = vmatpush1.msra.mxu0 0.0
    %2151 = vmatprep.subr.mxu0 0.0
    %2152 = vmatpush1.msra.mxu0 0.0
    %2153 = vmatprep.subr.mxu0 0.0
    %2154 = vmatpush1.msra.mxu0 0.0
    %2155 = vmatprep.subr.mxu0 0.0
    %2156 = vmatpush1.msra.mxu0 %v2120
    %2157 = vmatprep.subr.mxu0 0.0
    %2158 = vmatpush1.msra.mxu0 %v2119
    %2159 = vmatprep.subr.mxu0 0.0
    %2160 = vmatpush1.msra.mxu0 %v2118
    %2161 = vmatprep.subr.mxu0 0.0
    %2162 = vmatpush1.msra.mxu0 %v2117
    %2163 = vmatprep.subr.mxu0 0.0
    %2164 = vmatpush2.msra.mxu0 0.0
    %2165 = vmatprep.subr.mxu0 0.0
    %2166 = vmatpush2.msra.mxu0 0.0
    %2167 = vmatprep.subr.mxu0 0.0
    %2168 = vmatpush2.msra.mxu0 0.0
    %2169 = vmatprep.subr.mxu0 0.0
    %2170 = vmatpush2.msra.mxu0 0.0
    %2171 = vmatprep.subr.mxu0 0.0
    %2172 = vmatpush2.msra.mxu0 0.0
    %2173 = vmatprep.subr.mxu0 0.0
    %2174 = vmatpush2.msra.mxu0 0.0
    %2175 = vmatprep.subr.mxu0 0.0
    %2176 = vmatpush2.msra.mxu0 0.0
    %2177 = vmatprep.subr.mxu0 0.0
    %2178 = vmatpush2.msra.mxu0 0.0
    %2179 = vmatprep.subr.mxu0 0.0
    %2180 = vmatpush2.msra.mxu0 0.0
    %2181 = vmatprep.subr.mxu0 0.0
    %2182 = vmatpush2.msra.mxu0 0.0
    %2183 = vmatprep.subr.mxu0 0.0
    %2184 = vmatpush2.msra.mxu0 0.0
    %2185 = vmatprep.subr.mxu0 0.0
    %2186 = vmatpush2.msra.mxu0 0.0
    %2187 = vmatprep.subr.mxu0 0.0
    %2188 = vmatpush2.msra.mxu0 0.0
    %2189 = vmatprep.subr.mxu0 0.0
    %2190 = vmatpush2.msra.mxu0 0.0
    %2191 = vmatprep.subr.mxu0 0.0
    %2192 = vmatpush2.msra.mxu0 0.0
    %2193 = vmatprep.subr.mxu0 0.0
    %2194 = vmatpush2.msra.mxu0 0.0
    %2195 = vmatprep.mubr.f32.mxu0 0.0
    %2196 = vmatmul.mubr.f32.gmra.mxu0 %v2126
    %v2197 = vpop.f32.mrf.mxu0
    %v2198 = vadd.f32 %v2124, %v2197
    %v2199 = vpop.f32.mrf.mxu0
    %2200 = vmatprep.mubr.f32.mxu0 0.0
    %2201 = vmatmul.mubr.f32.gmra.mxu0 %v2129
    %v2202 = vpop.f32.mrf.mxu0
    %v2203 = vadd.f32 %v2124, %v2202
    %v2204 = vpop.f32.mrf.mxu0
    %2205 = vdwg.mxu0
    %v2206 = vmax.f32 %v2198, 0.0
    %v2207 = vmax.f32 %v2203, 0.0
    %v2208 = vld [vmem:[%s4] sm:$0xff]
    %v2209 = vld [vmem:[%s4 + $0x8] sm:$0xff]
    %v2210 = vld [vmem:[%s4 + $0x10] sm:$0xff]
    %v2211 = vld [vmem:[%s4 + $0x18] sm:$0xff]
    %v2212 = vld [vmem:[%s4 + $0x20] sm:$0xff]
    %v2213 = vld [vmem:[%s4 + $0x28] sm:$0xff]
    %v2214 = vld [vmem:[%s4 + $0x30] sm:$0xff]
    %v2215 = vld [vmem:[%s4 + $0x38] sm:$0xff]
    %v2216 = vlaneseq
    %v2217 = vshrl.u32 %v2216, 7
    %v2218 = vsub.s32 5, %v2217
    %v2219 = vrot.slane %v54, %v2218
    %vm2220 = vcmask 523264
    %v2222 = vsel %vm2220, %v2206, 0
    %v2225 = vsel %vm2220, %v2207, 0
    %2227 = vmatprep.subr.mxu0 0.0
    %2228 = vmatpush1.msra.mxu0 0.0
    %2229 = vmatprep.subr.mxu0 0.0
    %2230 = vmatpush1.msra.mxu0 0.0
    %2231 = vmatprep.subr.mxu0 0.0
    %2232 = vmatpush1.msra.mxu0 0.0
    %2233 = vmatprep.subr.mxu0 0.0
    %2234 = vmatpush1.msra.mxu0 0.0
    %2235 = vmatprep.subr.mxu0 0.0
    %2236 = vmatpush1.msra.mxu0 0.0
    %2237 = vmatprep.subr.mxu0 0.0
    %2238 = vmatpush1.msra.mxu0 0.0
    %2239 = vmatprep.subr.mxu0 0.0
    %2240 = vmatpush1.msra.mxu0 0.0
    %2241 = vmatprep.subr.mxu0 0.0
    %2242 = vmatpush1.msra.mxu0 0.0
    %2243 = vmatprep.subr.mxu0 0.0
    %2244 = vmatpush1.msra.mxu0 %v2215
    %2245 = vmatprep.subr.mxu0 0.0
    %2246 = vmatpush1.msra.mxu0 %v2214
    %2247 = vmatprep.subr.mxu0 0.0
    %2248 = vmatpush1.msra.mxu0 %v2213
    %2249 = vmatprep.subr.mxu0 0.0
    %2250 = vmatpush1.msra.mxu0 %v2212
    %2251 = vmatprep.subr.mxu0 0.0
    %2252 = vmatpush1.msra.mxu0 %v2211
    %2253 = vmatprep.subr.mxu0 0.0
    %2254 = vmatpush1.msra.mxu0 %v2210
    %2255 = vmatprep.subr.mxu0 0.0
    %2256 = vmatpush1.msra.mxu0 %v2209
    %2257 = vmatprep.subr.mxu0 0.0
    %2258 = vmatpush1.msra.mxu0 %v2208
    %2259 = vmatprep.subr.mxu0 0.0
    %2260 = vmatpush2.msra.mxu0 0.0
    %2261 = vmatprep.subr.mxu0 0.0
    %2262 = vmatpush2.msra.mxu0 0.0
    %2263 = vmatprep.subr.mxu0 0.0
    %2264 = vmatpush2.msra.mxu0 0.0
    %2265 = vmatprep.subr.mxu0 0.0
    %2266 = vmatpush2.msra.mxu0 0.0
    %2267 = vmatprep.subr.mxu0 0.0
    %2268 = vmatpush2.msra.mxu0 0.0
    %2269 = vmatprep.subr.mxu0 0.0
    %2270 = vmatpush2.msra.mxu0 0.0
    %2271 = vmatprep.subr.mxu0 0.0
    %2272 = vmatpush2.msra.mxu0 0.0
    %2273 = vmatprep.subr.mxu0 0.0
    %2274 = vmatpush2.msra.mxu0 0.0
    %2275 = vmatprep.subr.mxu0 0.0
    %2276 = vmatpush2.msra.mxu0 0.0
    %2277 = vmatprep.subr.mxu0 0.0
    %2278 = vmatpush2.msra.mxu0 0.0
    %2279 = vmatprep.subr.mxu0 0.0
    %2280 = vmatpush2.msra.mxu0 0.0
    %2281 = vmatprep.subr.mxu0 0.0
    %2282 = vmatpush2.msra.mxu0 0.0
    %2283 = vmatprep.subr.mxu0 0.0
    %2284 = vmatpush2.msra.mxu0 0.0
    %2285 = vmatprep.subr.mxu0 0.0
    %2286 = vmatpush2.msra.mxu0 0.0
    %2287 = vmatprep.subr.mxu0 0.0
    %2288 = vmatpush2.msra.mxu0 0.0
    %2289 = vmatprep.subr.mxu0 0.0
    %2290 = vmatpush2.msra.mxu0 0.0
    %2291 = vmatprep.mubr.f32.mxu0 0.0
    %2292 = vmatmul.mubr.f32.gmra.mxu0 %v2222
    %v2293 = vpop.f32.mrf.mxu0
    %v2294 = vadd.f32 %v2219, %v2293
    %v2295 = vpop.f32.mrf.mxu0
    %2296 = vmatprep.mubr.f32.mxu0 0.0
    %2297 = vmatmul.mubr.f32.gmra.mxu0 %v2225
    %v2298 = vpop.f32.mrf.mxu0
    %v2299 = vadd.f32 %v2219, %v2298
    %v2300 = vpop.f32.mrf.mxu0
    %2301 = vdwg.mxu0
    %v2302 = vadd.f32 %v2115, %v2294
    %v2303 = vadd.f32 %v2116, %v2299
    %v2304 = vsel %vm63, %v2302, 0.0
    %2305 = vadd.xlane.f32.xlu0 %v2304
    %v2306 = vpop.xlane.xlu0 %2305
    %v2307 = vsel %vm63, %v2303, 0.0
    %2308 = vadd.xlane.f32.xlu0 %v2307
    %v2309 = vpop.xlane.xlu0 %2308
    %v2310 = vmul.f32 %v2306, %v2084
    %v2311 = vmul.f32 %v2309, %v2084
    %v2312 = vsub.f32 %v2302, %v2310
    %v2313 = vsub.f32 %v2303, %v2311
    %v2314 = vmul.f32 %v2312, %v2312
    %v2315 = vmul.f32 %v2313, %v2313
    %v2316 = vsel %vm63, %v2314, 0.0
    %2317 = vadd.xlane.f32.xlu0 %v2316
    %v2318 = vpop.xlane.xlu0 %2317
    %v2319 = vsel %vm63, %v2315, 0.0
    %2320 = vadd.xlane.f32.xlu0 %v2319
    %v2321 = vpop.xlane.xlu0 %2320
    %v2322 = vmul.f32 %v2318, %v2084
    %v2323 = vmul.f32 %v2321, %v2084
    %v2324 = vadd.f32 %v2322, 1e-05
    %v2325 = vadd.f32 %v2323, 1e-05
    %v2326 = vrsqrt.pop %v2324
    %v2327 = vrsqrt.pop %v2325
    %v2328 = vmul.f32 %v2312, %v2326
    %v2329 = vmul.f32 %v2313, %v2327
    %v2330 = vlaneseq
    %v2331 = vshrl.u32 %v2330, 7
    %v2332 = vsub.s32 6, %v2331
    %v2333 = vrot.slane %v54, %v2332
    %v2334 = vmul.f32 %v2328, %v2333
    %v2335 = vmul.f32 %v2329, %v2333
    %v2336 = vlaneseq
    %v2337 = vshrl.u32 %v2336, 7
    %v2338 = vsub.s32 7, %v2337
    %v2339 = vrot.slane %v54, %v2338
    %v2340 = vadd.f32 %v2334, %v2339
    %v2341 = vadd.f32 %v2335, %v2339
    %2342 = vst.msk [vmem:[#allocation7] sm:$0xff] %vm63, %v2340
    %2343 = vst.msk [vmem:[#allocation7 + $0x8] sm:$0xff] %vm63, %v2341
    // Predicated region
    $region34: #{tpu_custom_call.1} parent=1 // pred_check
      _
    $region35: #{tpu_custom_call.1} parent=1 // pred_check_branch
      %2345 = sbr.rel (0) target = $region37
    $region36: #{tpu_custom_call.1} parent=1 // pred_region
      %s2347 = ssub.s32 256, 256
      %2348 = vsyncadd [#allocation4], %s2347
      %s2349 = sshll.u32 [#allocation7], 4
      %s2350 = int_to_ptr.vmem [resolvable:$true] %s2349
      %2355 = dma.vmem_to_hbm [thread:$0]  %s2350, 256, %s6, [#allocation4], 128, 128, 8
    $region37: #{tpu_custom_call.1} parent=1 // pred_fallthru
      _
    // Predicated region
    $region38: #{tpu_custom_call.1} parent=1 // pred_check
      _
    $region39: #{tpu_custom_call.1} parent=1 // pred_check_branch
      %2357 = sbr.rel (0) target = $region41
    $region40: #{tpu_custom_call.1} parent=1 // pred_region
      %2358 = dma.done [#allocation4], 256
    $region41: #{tpu_custom_call.1} parent=1 // pred_fallthru
      _
    %2359 = vsyncpa [#allocation3], 1
    %2360 = vsyncpa [#allocation6], 1
    %2361 = vsyncpa [#allocation4], 1

</llo_original>
